<compile_context>
chip_gen: v7x
topology: tpu7x:2x2x1
jax: 0.10.0
libtpu: 0.0.40
codegen_flags: <defaults>
</compile_context>

<pallas_src>
import functools

import jax
import jax.numpy as jnp
from jax.experimental import pallas as pl
from jax.experimental.pallas import tpu as pltpu


def _round_up(x, m):
    return (x + m - 1) // m * m


def conv_bn_relu_kernel(x_ref, w_ref, gamma_ref, beta_ref, o_ref, y_ref,
                        *, K, H, W, eps, compute_dtype):
    # x_ref     : (1, H+K-1, W+K-1, Cin)  spatially padded input, one batch elem
    # w_ref     : (KKC_pad, Cout_pad)     im2col-flattened, zero-padded weights
    # gamma_ref : (1, Cout_pad)
    # beta_ref  : (1, Cout_pad)
    # o_ref     : (N, H*W, Cout_pad)      resident output (written on last step)
    # y_ref     : (N, H*W, Cout_pad)      VMEM scratch: raw conv output (f32)
    n = pl.program_id(0)
    N, HW, Cout_pad = y_ref.shape
    Cin = x_ref.shape[-1]
    KKC_pad = w_ref.shape[0]

    # --- im2col: one lane-dense (HW, KKC_pad) tile -> single deep contraction.
    patches = []
    for i in range(K):
        for j in range(K):
            patches.append(x_ref[0, i:i + H, j:j + W, :].reshape(HW, Cin))
    pad_cols = KKC_pad - K * K * Cin
    if pad_cols:
        patches.append(jnp.zeros((HW, pad_cols), dtype=x_ref.dtype))
    cols = jnp.concatenate(patches, axis=-1).astype(compute_dtype)

    y = jnp.dot(cols, w_ref[...].astype(compute_dtype),
                preferred_element_type=jnp.float32)        # (HW, Cout_pad) f32
    y_ref[n] = y

    # --- last batch element: BN (two-pass batch statistics) + ReLU, fused. ---
    @pl.when(n == N - 1)
    def _finalize():
        yf = y_ref[...].reshape(N * HW, Cout_pad)
        mean = jnp.mean(yf, axis=0, keepdims=True)                  # (1, C)
        var = jnp.mean((yf - mean) ** 2, axis=0, keepdims=True)     # (1, C)
        scale = gamma_ref[...] * jax.lax.rsqrt(var + eps)
        bias = beta_ref[...] - mean * scale
        o_ref[...] = jnp.maximum(yf * scale + bias,
                                 0.0).reshape(N, HW, Cout_pad)


def conv2d_bn_relu(x_nchw, w_oihw, gamma, beta, eps=1e-5,
                   compute_dtype=jnp.float32):
    # compute_dtype=jnp.bfloat16 gives ~3x MXU throughput (f32 accumulation is
    # preserved); default f32 matches the PyTorch module's numerics.
    N, Cin, H, W = x_nchw.shape
    Cout, _, K, _ = w_oihw.shape
    pad = (K - 1) // 2
    Hp, Wp = H + 2 * pad, W + 2 * pad
    HW = H * W
    KKC = K * K * Cin
    KKC_pad = _round_up(KKC, 128)
    Cout_pad = _round_up(Cout, 128)

    # Layout glue (XLA): NCHW -> NHWC, OIHW -> flattened HWIO [(i*K+j)*Cin + c],
    # zero-pad channel dims so the kernel's lane dimension is a dense x128.
    x = jnp.transpose(x_nchw, (0, 2, 3, 1)).astype(jnp.float32)
    xp = jnp.pad(x, ((0, 0), (pad, pad), (pad, pad), (0, 0)))
    w_flat = jnp.transpose(w_oihw, (2, 3, 1, 0)).reshape(KKC, Cout)
    w_p = jnp.zeros((KKC_pad, Cout_pad), jnp.float32).at[:KKC, :Cout].set(
        w_flat.astype(jnp.float32))
    gamma_p = jnp.zeros((1, Cout_pad), jnp.float32).at[0, :Cout].set(
        gamma.astype(jnp.float32))
    beta_p = jnp.zeros((1, Cout_pad), jnp.float32).at[0, :Cout].set(
        beta.astype(jnp.float32))

    kernel = functools.partial(conv_bn_relu_kernel, K=K, H=H, W=W, eps=eps,
                               compute_dtype=compute_dtype)

    o = pl.pallas_call(
        kernel,
        grid=(N,),
        in_specs=[
            pl.BlockSpec((1, Hp, Wp, Cin), lambda n: (n, 0, 0, 0)),
            pl.BlockSpec((KKC_pad, Cout_pad), lambda n: (0, 0)),
            pl.BlockSpec((1, Cout_pad), lambda n: (0, 0)),
            pl.BlockSpec((1, Cout_pad), lambda n: (0, 0)),
        ],
        out_specs=pl.BlockSpec((N, HW, Cout_pad), lambda n: (0, 0, 0)),
        out_shape=jax.ShapeDtypeStruct((N, HW, Cout_pad), jnp.float32),
        scratch_shapes=[pltpu.VMEM((N, HW, Cout_pad), jnp.float32)],
        compiler_params=pltpu.CompilerParams(
            dimension_semantics=("arbitrary",)),
    )(xp, w_p, gamma_p, beta_p)

    o = o[:, :, :Cout].reshape(N, H, W, Cout)
    return jnp.transpose(o, (0, 3, 1, 2))   # back to NCHW


def reference(x_nchw, w_oihw, gamma, beta, eps=1e-5):
    y = jax.lax.conv_general_dilated(
        x_nchw, w_oihw, window_strides=(1, 1),
        padding=((1, 1), (1, 1)),
        dimension_numbers=("NCHW", "OIHW", "NCHW"))
    mean = jnp.mean(y, axis=(0, 2, 3), keepdims=True)
    var = jnp.mean((y - mean) ** 2, axis=(0, 2, 3), keepdims=True)
    yn = (y - mean) / jnp.sqrt(var + eps)
    yn = yn * gamma.reshape(1, -1, 1, 1) + beta.reshape(1, -1, 1, 1)
    return jnp.maximum(yn, 0.0)


if __name__ == "__main__":
    N, Cin, Cout, H, W, K = 2, 4, 8, 16, 16, 3

    key = jax.random.PRNGKey(0)
    kx, kw, kg, kb = jax.random.split(key, 4)
    x = jax.random.normal(kx, (N, Cin, H, W), dtype=jnp.float32)
    weight = jax.random.normal(kw, (Cout, Cin, K, K), dtype=jnp.float32) * 0.1
    gamma = 1.0 + 0.1 * jax.random.normal(kg, (Cout,), dtype=jnp.float32)
    beta = 0.1 * jax.random.normal(kb, (Cout,), dtype=jnp.float32)

    out = conv2d_bn_relu(x, weight, gamma, beta)
    out = jax.block_until_ready(out)

    ref = reference(x, weight, gamma, beta)
    assert out.shape == (N, Cout, H, W)
    assert jnp.allclose(out, ref, rtol=1e-4, atol=1e-4), (
        float(jnp.max(jnp.abs(out - ref))))

    print("KERNEL_OK")
</pallas_src>

<mosaic_0001>
module attributes {stable_mosaic.version = 11 : i64} {
  func.func @conv_bn_relu_kernel(%arg0: i32, %arg1: memref<1x18x18x4xf32, #tpu.memory_space<vmem>>, %arg2: memref<128x128xf32, #tpu.memory_space<vmem>>, %arg3: memref<1x128xf32, #tpu.memory_space<vmem>>, %arg4: memref<1x128xf32, #tpu.memory_space<vmem>>, %arg5: memref<2x256x128xf32, #tpu.memory_space<vmem>>, %arg6: memref<2x256x128xf32, #tpu.memory_space<vmem>>) attributes {dimension_semantics = [#tpu.dimension_semantics<arbitrary>], iteration_bounds = array<i64: 2>, scalar_prefetch = 0 : i64, scratch_operands = 1 : i64, tpu.core_type = #tpu.core_type<tc>, window_params = [{transform_indices = @transform_0, window_bounds = array<i64: 1, 18, 18, 4>}, {pipeline_mode = #tpu.pipeline_mode<synchronous>, transform_indices = @transform_1, window_bounds = array<i64: 128, 128>}, {pipeline_mode = #tpu.pipeline_mode<synchronous>, transform_indices = @transform_2, window_bounds = array<i64: 1, 128>}, {pipeline_mode = #tpu.pipeline_mode<synchronous>, transform_indices = @transform_3, window_bounds = array<i64: 1, 128>}, {pipeline_mode = #tpu.pipeline_mode<synchronous>, transform_indices = @transform_4, window_bounds = array<i64: 2, 256, 128>}]} {
    %c0 = arith.constant 0 : index
    %c0_0 = arith.constant 0 : index
    %c0_1 = arith.constant 0 : index
    %c0_2 = arith.constant 0 : index
    %0 = vector.load %arg1[%c0, %c0_0, %c0_1, %c0_2] : memref<1x18x18x4xf32, #tpu.memory_space<vmem>>, vector<1x16x16x4xf32>
    %1 = vector.shape_cast %0 : vector<1x16x16x4xf32> to vector<16x16x4xf32>
    %2 = vector.shape_cast %1 : vector<16x16x4xf32> to vector<256x4xf32>
    %c0_3 = arith.constant 0 : index
    %c0_4 = arith.constant 0 : index
    %c1 = arith.constant 1 : index
    %c0_5 = arith.constant 0 : index
    %3 = vector.load %arg1[%c0_3, %c0_4, %c1, %c0_5] : memref<1x18x18x4xf32, #tpu.memory_space<vmem>>, vector<1x16x16x4xf32>
    %4 = vector.shape_cast %3 : vector<1x16x16x4xf32> to vector<16x16x4xf32>
    %5 = vector.shape_cast %4 : vector<16x16x4xf32> to vector<256x4xf32>
    %c0_6 = arith.constant 0 : index
    %c0_7 = arith.constant 0 : index
    %c2 = arith.constant 2 : index
    %c0_8 = arith.constant 0 : index
    %6 = vector.load %arg1[%c0_6, %c0_7, %c2, %c0_8] : memref<1x18x18x4xf32, #tpu.memory_space<vmem>>, vector<1x16x16x4xf32>
    %7 = vector.shape_cast %6 : vector<1x16x16x4xf32> to vector<16x16x4xf32>
    %8 = vector.shape_cast %7 : vector<16x16x4xf32> to vector<256x4xf32>
    %c0_9 = arith.constant 0 : index
    %c1_10 = arith.constant 1 : index
    %c0_11 = arith.constant 0 : index
    %c0_12 = arith.constant 0 : index
    %9 = vector.load %arg1[%c0_9, %c1_10, %c0_11, %c0_12] : memref<1x18x18x4xf32, #tpu.memory_space<vmem>>, vector<1x16x16x4xf32>
    %10 = vector.shape_cast %9 : vector<1x16x16x4xf32> to vector<16x16x4xf32>
    %11 = vector.shape_cast %10 : vector<16x16x4xf32> to vector<256x4xf32>
    %c0_13 = arith.constant 0 : index
    %c1_14 = arith.constant 1 : index
    %c1_15 = arith.constant 1 : index
    %c0_16 = arith.constant 0 : index
    %12 = vector.load %arg1[%c0_13, %c1_14, %c1_15, %c0_16] : memref<1x18x18x4xf32, #tpu.memory_space<vmem>>, vector<1x16x16x4xf32>
    %13 = vector.shape_cast %12 : vector<1x16x16x4xf32> to vector<16x16x4xf32>
    %14 = vector.shape_cast %13 : vector<16x16x4xf32> to vector<256x4xf32>
    %c0_17 = arith.constant 0 : index
    %c1_18 = arith.constant 1 : index
    %c2_19 = arith.constant 2 : index
    %c0_20 = arith.constant 0 : index
    %15 = vector.load %arg1[%c0_17, %c1_18, %c2_19, %c0_20] : memref<1x18x18x4xf32, #tpu.memory_space<vmem>>, vector<1x16x16x4xf32>
    %16 = vector.shape_cast %15 : vector<1x16x16x4xf32> to vector<16x16x4xf32>
    %17 = vector.shape_cast %16 : vector<16x16x4xf32> to vector<256x4xf32>
    %c0_21 = arith.constant 0 : index
    %c2_22 = arith.constant 2 : index
    %c0_23 = arith.constant 0 : index
    %c0_24 = arith.constant 0 : index
    %18 = vector.load %arg1[%c0_21, %c2_22, %c0_23, %c0_24] : memref<1x18x18x4xf32, #tpu.memory_space<vmem>>, vector<1x16x16x4xf32>
    %19 = vector.shape_cast %18 : vector<1x16x16x4xf32> to vector<16x16x4xf32>
    %20 = vector.shape_cast %19 : vector<16x16x4xf32> to vector<256x4xf32>
    %c0_25 = arith.constant 0 : index
    %c2_26 = arith.constant 2 : index
    %c1_27 = arith.constant 1 : index
    %c0_28 = arith.constant 0 : index
    %21 = vector.load %arg1[%c0_25, %c2_26, %c1_27, %c0_28] : memref<1x18x18x4xf32, #tpu.memory_space<vmem>>, vector<1x16x16x4xf32>
    %22 = vector.shape_cast %21 : vector<1x16x16x4xf32> to vector<16x16x4xf32>
    %23 = vector.shape_cast %22 : vector<16x16x4xf32> to vector<256x4xf32>
    %c0_29 = arith.constant 0 : index
    %c2_30 = arith.constant 2 : index
    %c2_31 = arith.constant 2 : index
    %c0_32 = arith.constant 0 : index
    %24 = vector.load %arg1[%c0_29, %c2_30, %c2_31, %c0_32] : memref<1x18x18x4xf32, #tpu.memory_space<vmem>>, vector<1x16x16x4xf32>
    %25 = vector.shape_cast %24 : vector<1x16x16x4xf32> to vector<16x16x4xf32>
    %26 = vector.shape_cast %25 : vector<16x16x4xf32> to vector<256x4xf32>
    %cst = arith.constant 0.000000e+00 : f32
    %27 = vector.broadcast %cst : f32 to vector<256x92xf32>
    %28 = tpu.concatenate %2, %5, %8, %11, %14, %17, %20, %23, %26, %27 in 1 : vector<256x4xf32>, vector<256x4xf32>, vector<256x4xf32>, vector<256x4xf32>, vector<256x4xf32>, vector<256x4xf32>, vector<256x4xf32>, vector<256x4xf32>, vector<256x4xf32>, vector<256x92xf32> -> vector<256x128xf32>
    %c0_33 = arith.constant 0 : index
    %c0_34 = arith.constant 0 : index
    %29 = vector.load %arg2[%c0_33, %c0_34] : memref<128x128xf32, #tpu.memory_space<vmem>>, vector<128x128xf32>
    %cst_35 = arith.constant dense<0.000000e+00> : vector<256x128xf32>
    %30 = tpu.matmul %28, %29, %cst_35 {dimension_numbers = #tpu.dot_dimension_numbers<[1], [0], [0], [1], [0, 0, 1, 1], [], []>} : vector<256x128xf32>, vector<128x128xf32>, vector<256x128xf32> -> vector<256x128xf32>
    %31 = arith.index_cast %arg0 : i32 to index
    %c0_36 = arith.constant 0 : index
    %c0_37 = arith.constant 0 : index
    %32 = vector.load %arg6[%31, %c0_36, %c0_37] : memref<2x256x128xf32, #tpu.memory_space<vmem>>, vector<1x256x128xf32>
    %33 = vector.shape_cast %32 : vector<1x256x128xf32> to vector<256x128xf32>
    %34 = vector.shape_cast %30 : vector<256x128xf32> to vector<1x256x128xf32>
    tpu.vector_store %arg6[%31, %c0_36, %c0_37], %34 {strides = array<i32>} : memref<2x256x128xf32, #tpu.memory_space<vmem>>, vector<1x256x128xf32>,
    %c1_i32 = arith.constant 1 : i32
    %35 = arith.cmpi eq, %arg0, %c1_i32 : i32
    %36 = arith.extui %35 : i1 to i32
    %c0_i32 = arith.constant 0 : i32
    %37 = arith.cmpi ne, %36, %c0_i32 : i32
    scf.if %37 {
      %c0_38 = arith.constant 0 : index
      %c0_39 = arith.constant 0 : index
      %c0_40 = arith.constant 0 : index
      %38 = vector.load %arg6[%c0_38, %c0_39, %c0_40] : memref<2x256x128xf32, #tpu.memory_space<vmem>>, vector<2x256x128xf32>
      %39 = vector.shape_cast %38 : vector<2x256x128xf32> to vector<512x128xf32>
      %cst_41 = arith.constant dense<0.000000e+00> : vector<128xf32>
      %40 = vector.multi_reduction <add>, %39, %cst_41 [0] : vector<512x128xf32> to vector<128xf32>
      %41 = vector.shape_cast %40 : vector<128xf32> to vector<1x128xf32>
      %cst_42 = arith.constant 5.120000e+02 : f32
      %42 = vector.broadcast %cst_42 : f32 to vector<1x128xf32>
      %43 = arith.divf %41, %42 : vector<1x128xf32>
      %44 = vector.broadcast %43 : vector<1x128xf32> to vector<512x128xf32>
      %45 = arith.subf %39, %44 : vector<512x128xf32>
      %46 = arith.mulf %45, %45 : vector<512x128xf32>
      %cst_43 = arith.constant dense<0.000000e+00> : vector<128xf32>
      %47 = vector.multi_reduction <add>, %46, %cst_43 [0] : vector<512x128xf32> to vector<128xf32>
      %48 = vector.shape_cast %47 : vector<128xf32> to vector<1x128xf32>
      %cst_44 = arith.constant 5.120000e+02 : f32
      %49 = vector.broadcast %cst_44 : f32 to vector<1x128xf32>
      %50 = arith.divf %48, %49 : vector<1x128xf32>
      %c0_45 = arith.constant 0 : index
      %c0_46 = arith.constant 0 : index
      %51 = vector.load %arg3[%c0_45, %c0_46] : memref<1x128xf32, #tpu.memory_space<vmem>>, vector<1x128xf32>
      %cst_47 = arith.constant 9.99999974E-6 : f32
      %52 = vector.broadcast %cst_47 : f32 to vector<1x128xf32>
      %53 = arith.addf %50, %52 : vector<1x128xf32>
      %54 = math.rsqrt %53 : vector<1x128xf32>
      %55 = arith.mulf %51, %54 : vector<1x128xf32>
      %c0_48 = arith.constant 0 : index
      %c0_49 = arith.constant 0 : index
      %56 = vector.load %arg4[%c0_48, %c0_49] : memref<1x128xf32, #tpu.memory_space<vmem>>, vector<1x128xf32>
      %57 = arith.mulf %43, %55 : vector<1x128xf32>
      %58 = arith.subf %56, %57 : vector<1x128xf32>
      %59 = vector.broadcast %55 : vector<1x128xf32> to vector<512x128xf32>
      %60 = arith.mulf %39, %59 : vector<512x128xf32>
      %61 = vector.broadcast %58 : vector<1x128xf32> to vector<512x128xf32>
      %62 = arith.addf %60, %61 : vector<512x128xf32>
      %cst_50 = arith.constant 0.000000e+00 : f32
      %63 = vector.broadcast %cst_50 : f32 to vector<512x128xf32>
      %64 = arith.maximumf %62, %63 : vector<512x128xf32>
      %65 = vector.shape_cast %64 : vector<512x128xf32> to vector<2x256x128xf32>
      %c0_51 = arith.constant 0 : index
      %c0_52 = arith.constant 0 : index
      %c0_53 = arith.constant 0 : index
      %66 = vector.load %arg5[%c0_51, %c0_52, %c0_53] : memref<2x256x128xf32, #tpu.memory_space<vmem>>, vector<2x256x128xf32>
      tpu.vector_store %arg5[%c0_51, %c0_52, %c0_53], %65 {strides = array<i32>} : memref<2x256x128xf32, #tpu.memory_space<vmem>>, vector<2x256x128xf32>,
    } else {
    }
    return
  }
  func.func @transform_0(%arg0: i32) -> (i32, i32, i32, i32) {
    %c0_i32 = arith.constant 0 : i32
    %c0_i32_0 = arith.constant 0 : i32
    %c0_i32_1 = arith.constant 0 : i32
    %c0_i32_2 = arith.constant 0 : i32
    return %arg0, %c0_i32, %c0_i32_0, %c0_i32_1 : i32, i32, i32, i32
  }
  func.func @transform_1(%arg0: i32) -> (i32, i32) {
    %c0_i32 = arith.constant 0 : i32
    %c0_i32_0 = arith.constant 0 : i32
    %c0_i32_1 = arith.constant 0 : i32
    return %c0_i32, %c0_i32_0 : i32, i32
  }
  func.func @transform_2(%arg0: i32) -> (i32, i32) {
    %c0_i32 = arith.constant 0 : i32
    %c0_i32_0 = arith.constant 0 : i32
    %c0_i32_1 = arith.constant 0 : i32
    return %c0_i32, %c0_i32_0 : i32, i32
  }
  func.func @transform_3(%arg0: i32) -> (i32, i32) {
    %c0_i32 = arith.constant 0 : i32
    %c0_i32_0 = arith.constant 0 : i32
    %c0_i32_1 = arith.constant 0 : i32
    return %c0_i32, %c0_i32_0 : i32, i32
  }
  func.func @transform_4(%arg0: i32) -> (i32, i32, i32) {
    %c0_i32 = arith.constant 0 : i32
    %c0_i32_0 = arith.constant 0 : i32
    %c0_i32_1 = arith.constant 0 : i32
    %c0_i32_2 = arith.constant 0 : i32
    return %c0_i32, %c0_i32_0, %c0_i32_1 : i32, i32, i32
  }
}

</mosaic_0001>

<llo_original>
// kernel: tpu_custom_call.1
$region0: #{tpu_custom_call.1}
  #allocation0 [shape = 'u32[]', space=smem, size = 0x4, offset = 0x4, fixed_abs, tag = 'smem constant byte address 0x4 - core index']
  #allocation1 [shape = 'u32[144,128]{1,0:T(1,128)}', space=vmem, size = 0x12000, scoped, tag = 'internal scratch']
  #allocation2 [shape = 'f32[2,256,128]{2,1,0:T(8,128)}', space=vmem, size = 0x40000, scoped, tag = 'scratch operand']
  %s0 = inlined_call_operand.vmem [shape: f32[2,18,18,4], index: 0, kind: input, shape index: {}]
  %s1 = inlined_call_operand.vmem [shape: f32[128,128], index: 1, kind: input, shape index: {}]
  %s2 = inlined_call_operand.vmem [shape: f32[1,128], index: 2, kind: input, shape index: {}]
  %s3 = inlined_call_operand.vmem [shape: f32[1,128], index: 3, kind: input, shape index: {}]
  %s4 = inlined_call_operand.hbm [shape: f32[2,256,128], index: 4, kind: output, shape index: {}]
  %s5 = sld [smem:[#allocation0]]
  $region53: #{tpu_custom_call.1} parent=0
    _
  %s7 = ssub.s32 1, %s5
  %s8 = scalar_select 0, %s7, %s5
  $region1: #{tpu_custom_call.1} parent=0
    #allocation3 [shape = 'u8[262144]{0}', space=vmem, size = 0x40000, scoped, tag = 'output window, operand 0, single buffered']
    #allocation4 [shape = 's32[2]{0}', space=sflag, size = 0x8, scoped, tag = 'scoped memory for tpu_custom_call.1']
    %9 = vsyncpa [#allocation4], 0
    loop: start=0, step=1, limit=4
    $region2: #{tpu_custom_call.1} parent=1 // loop_pre_header
      _
    $region3: #{tpu_custom_call.1} parent=1 // loop_header
      %s11 = sphi 0, %s15
      %p12 = scmp.ge.s32.totalorder %s11, 4
      %s21 = sphi 0, %s23
      %s24 = sphi 0, %s21
      %s25 = sphi 0, %s24
      %s41 = sphi 0, %s25
      %s45 = sphi 0, %s45
      %s47 = sphi 0, %s45
      %s48 = sphi 0, %s47
      %s62 = sphi 0, %s48
      %s66 = sphi 0, %s66
      %s68 = sphi 0, %s66
      %s69 = sphi 0, %s68
      %s83 = sphi 0, %s69
      %s87 = sphi 0, %s87
      %s89 = sphi 0, %s87
      %s90 = sphi 0, %s89
      %s104 = sphi 0, %s90
      %s108 = sphi 0, %s108
      %s110 = sphi 0, %s108
      %s111 = sphi 0, %s110
      %s125 = sphi 0, %s111
    $region4: #{tpu_custom_call.1} parent=1 // loop_header_branch
      %14 = sbr.rel (%p12) target = $region8
    $region5: #{tpu_custom_call.1} parent=1 // loop_body
      %s16 = ssub.s32 %s11, 1
      %s17 = ssub.s32 %s11, 2
      %s18 = sadd.s32 %s11, 1
      %s19 = ssub.s32 %s11, %s18
      %p20 = scmp.eq.s32.totalorder %s19, 0
      %s22 = sadd.s32 %s21, 1
      %s23 = scalar_select %p20, %s21, %s22
      %p26 = pneg %p20
      %p27 = scmp.eq.s32.totalorder %s11, 1
      %p28 = por %p26, %p27
      %p29 = scmp.ne.s32.totalorder %s21, %s24
      %p30 = scmp.eq.s32.totalorder %s11, 0
      %p31 = por %p29, %p30
      %p32 = scmp.ne.s32.totalorder %s21, %s24
      %p33 = scmp.eq.s32.totalorder %s16, 1
      %p34 = por %p32, %p33
      %p35 = scmp.ne.s32.totalorder %s24, %s25
      %p36 = scmp.eq.s32.totalorder %s16, 0
      %p37 = por %p35, %p36
      %p38 = scmp.ne.s32.totalorder %s24, %s25
      %p39 = scmp.eq.s32.totalorder %s17, 1
      %p40 = por %p38, %p39
      %p42 = scmp.ne.s32.totalorder %s25, %s41
      %p43 = scmp.eq.s32.totalorder %s17, 0
      %p44 = por %p42, %p43
      %s46 = sadd.s32 %s45, 1
      %p49 = scmp.eq.s32.totalorder %s11, 1
      %p50 = scmp.ne.s32.totalorder %s45, %s47
      %p51 = scmp.eq.s32.totalorder %s11, 0
      %p52 = por %p50, %p51
      %p53 = scmp.ne.s32.totalorder %s45, %s47
      %p54 = scmp.eq.s32.totalorder %s16, 1
      %p55 = por %p53, %p54
      %p56 = scmp.ne.s32.totalorder %s47, %s48
      %p57 = scmp.eq.s32.totalorder %s16, 0
      %p58 = por %p56, %p57
      %p59 = scmp.ne.s32.totalorder %s47, %s48
      %p60 = scmp.eq.s32.totalorder %s17, 1
      %p61 = por %p59, %p60
      %p63 = scmp.ne.s32.totalorder %s48, %s62
      %p64 = scmp.eq.s32.totalorder %s17, 0
      %p65 = por %p63, %p64
      %s67 = sadd.s32 %s66, 1
      %p70 = scmp.eq.s32.totalorder %s11, 1
      %p71 = scmp.ne.s32.totalorder %s66, %s68
      %p72 = scmp.eq.s32.totalorder %s11, 0
      %p73 = por %p71, %p72
      %p74 = scmp.ne.s32.totalorder %s66, %s68
      %p75 = scmp.eq.s32.totalorder %s16, 1
      %p76 = por %p74, %p75
      %p77 = scmp.ne.s32.totalorder %s68, %s69
      %p78 = scmp.eq.s32.totalorder %s16, 0
      %p79 = por %p77, %p78
      %p80 = scmp.ne.s32.totalorder %s68, %s69
      %p81 = scmp.eq.s32.totalorder %s17, 1
      %p82 = por %p80, %p81
      %p84 = scmp.ne.s32.totalorder %s69, %s83
      %p85 = scmp.eq.s32.totalorder %s17, 0
      %p86 = por %p84, %p85
      %s88 = sadd.s32 %s87, 1
      %p91 = scmp.eq.s32.totalorder %s11, 1
      %p92 = scmp.ne.s32.totalorder %s87, %s89
      %p93 = scmp.eq.s32.totalorder %s11, 0
      %p94 = por %p92, %p93
      %p95 = scmp.ne.s32.totalorder %s87, %s89
      %p96 = scmp.eq.s32.totalorder %s16, 1
      %p97 = por %p95, %p96
      %p98 = scmp.ne.s32.totalorder %s89, %s90
      %p99 = scmp.eq.s32.totalorder %s16, 0
      %p100 = por %p98, %p99
      %p101 = scmp.ne.s32.totalorder %s89, %s90
      %p102 = scmp.eq.s32.totalorder %s17, 1
      %p103 = por %p101, %p102
      %p105 = scmp.ne.s32.totalorder %s90, %s104
      %p106 = scmp.eq.s32.totalorder %s17, 0
      %p107 = por %p105, %p106
      %s109 = sadd.s32 %s108, 1
      %p112 = scmp.eq.s32.totalorder %s11, 1
      %p113 = scmp.ne.s32.totalorder %s108, %s110
      %p114 = scmp.eq.s32.totalorder %s11, 0
      %p115 = por %p113, %p114
      %p116 = scmp.ne.s32.totalorder %s108, %s110
      %p117 = scmp.eq.s32.totalorder %s16, 1
      %p118 = por %p116, %p117
      %p119 = scmp.ne.s32.totalorder %s110, %s111
      %p120 = scmp.eq.s32.totalorder %s16, 0
      %p121 = por %p119, %p120
      %p122 = scmp.ne.s32.totalorder %s110, %s111
      %p123 = scmp.eq.s32.totalorder %s17, 1
      %p124 = por %p122, %p123
      %p126 = scmp.ne.s32.totalorder %s111, %s125
      %p127 = scmp.eq.s32.totalorder %s17, 0
      %p128 = por %p126, %p127
      %p129 = scmp.le.s32.totalorder 1, %s11
      %p130 = scmp.lt.s32.totalorder %s11, 3
      %p131 = pnand %p129, %p130
      %p132 = pneg %p131
      // Predicated region
      $region9: #{tpu_custom_call.1} parent=5 // pred_check
        _
      $region10: #{tpu_custom_call.1} parent=5 // pred_check_branch
        %134 = sbr.rel (%p131) target = $region12
      $region11: #{tpu_custom_call.1} parent=5 // pred_region
        %s135 = ssub.s32 %s11, 1
        // Predicated region
        $region13: #{tpu_custom_call.1} parent=11 // pred_check
          %p136 = pneg %p58
        $region14: #{tpu_custom_call.1} parent=11 // pred_check_branch
          %138 = sbr.rel (%p136) target = $region16
        $region15: #{tpu_custom_call.1} parent=11 // pred_region
          _
        $region16: #{tpu_custom_call.1} parent=11 // pred_fallthru
          _
        // Predicated region
        $region17: #{tpu_custom_call.1} parent=11 // pred_check
          %p139 = pneg %p79
        $region18: #{tpu_custom_call.1} parent=11 // pred_check_branch
          %141 = sbr.rel (%p139) target = $region20
        $region19: #{tpu_custom_call.1} parent=11 // pred_region
          _
        $region20: #{tpu_custom_call.1} parent=11 // pred_fallthru
          _
        // Predicated region
        $region21: #{tpu_custom_call.1} parent=11 // pred_check
          %p142 = pneg %p100
        $region22: #{tpu_custom_call.1} parent=11 // pred_check_branch
          %144 = sbr.rel (%p142) target = $region24
        $region23: #{tpu_custom_call.1} parent=11 // pred_region
          _
        $region24: #{tpu_custom_call.1} parent=11 // pred_fallthru
          _
      $region12: #{tpu_custom_call.1} parent=5 // pred_fallthru
        _
      %p145 = scmp.lt.s32.totalorder %s11, 2
      // Predicated region
      $region25: #{tpu_custom_call.1} parent=5 // pred_check
        %p146 = pneg %p145
      $region26: #{tpu_custom_call.1} parent=5 // pred_check_branch
        %148 = sbr.rel (%p146) target = $region28
      $region27: #{tpu_custom_call.1} parent=5 // pred_region
        // Predicated region
        $region29: #{tpu_custom_call.1} parent=27 // pred_check
          %p149 = pneg %p31
        $region30: #{tpu_custom_call.1} parent=27 // pred_check_branch
          %151 = sbr.rel (%p149) target = $region32
        $region31: #{tpu_custom_call.1} parent=27 // pred_region
          %p152 = scmp.lt.s32.totalorder %s11, 1
          %s153 = scalar_select %p152, %s11, 1
          %s154 = smul.addr %s153, 54
          %s155 = smul.addr %s154, 8
          %s156 = scalar_lea.vmem %s0, %s155
        $region32: #{tpu_custom_call.1} parent=27 // pred_fallthru
          _
      $region28: #{tpu_custom_call.1} parent=5 // pred_fallthru
        _
      %p157 = scmp.le.s32.totalorder 1, %s11
      %p158 = scmp.lt.s32.totalorder %s11, 3
      %p159 = pnand %p157, %p158
      %p160 = pneg %p159
      // Predicated region
      $region33: #{tpu_custom_call.1} parent=5 // pred_check
        _
      $region34: #{tpu_custom_call.1} parent=5 // pred_check_branch
        %162 = sbr.rel (%p159) target = $region36
      $region35: #{tpu_custom_call.1} parent=5 // pred_region
        %s163 = ssub.s32 %s11, 1
        %p164 = scmp.lt.s32.totalorder %s16, 1
        %s165 = scalar_select %p164, %s16, 1
        %s166 = smul.addr %s165, 54
        %s167 = smul.addr %s166, 8
        %s168 = scalar_lea.vmem %s0, %s167
        %p169 = pneg %p37
        %p170 = pneg %p34
        %p171 = pneg %p58
        %p172 = pneg %p55
        %p173 = pneg %p79
        %p174 = pneg %p76
        %p175 = pneg %p100
        %p176 = pneg %p97
        %p177 = pneg %p121
        %p178 = pneg %p118
        %p179 = scmp.lt.s32.totalorder %s16, 1
        %s180 = scalar_select %p179, %s16, 1
        %s181 = smul.addr %s180, 54
        %s182 = smul.addr %s181, 8
        %s183 = scalar_lea.vmem %s0, %s182
        %v184 = vld [vmem:[%s183] sm:$0xff]
        %v185 = vld [vmem:[%s183 + $0x8] sm:$0xff]
        %v186 = vld [vmem:[%s183 + $0x18] sm:$0xff]
        %v187 = vld [vmem:[%s183 + $0x20] sm:$0xff]
        %v188 = vld [vmem:[%s183 + $0x30] sm:$0xff]
        %v189 = vld [vmem:[%s183 + $0x38] sm:$0xff]
        %v190 = vld [vmem:[%s183 + $0x48] sm:$0xff]
        %v191 = vld [vmem:[%s183 + $0x50] sm:$0xff]
        %v192 = vld [vmem:[%s183 + $0x60] sm:$0xff]
        %v193 = vld [vmem:[%s183 + $0x68] sm:$0xff]
        %v194 = vld [vmem:[%s183 + $0x78] sm:$0xff]
        %v195 = vld [vmem:[%s183 + $0x80] sm:$0xff]
        %v196 = vld [vmem:[%s183 + $0x90] sm:$0xff]
        %v197 = vld [vmem:[%s183 + $0x98] sm:$0xff]
        %v198 = vld [vmem:[%s183 + $0xa8] sm:$0xff]
        %v199 = vld [vmem:[%s183 + $0xb0] sm:$0xff]
        %v200 = vld [vmem:[%s183 + $0xc0] sm:$0xff]
        %v201 = vld [vmem:[%s183 + $0xc8] sm:$0xff]
        %v202 = vld [vmem:[%s183 + $0xd8] sm:$0xff]
        %v203 = vld [vmem:[%s183 + $0xe0] sm:$0xff]
        %v204 = vld [vmem:[%s183 + $0xf0] sm:$0xff]
        %v205 = vld [vmem:[%s183 + $0xf8] sm:$0xff]
        %v206 = vld [vmem:[%s183 + $0x108] sm:$0xff]
        %v207 = vld [vmem:[%s183 + $0x110] sm:$0xff]
        %v208 = vld [vmem:[%s183 + $0x120] sm:$0xff]
        %v209 = vld [vmem:[%s183 + $0x128] sm:$0xff]
        %v210 = vld [vmem:[%s183 + $0x138] sm:$0xff]
        %v211 = vld [vmem:[%s183 + $0x140] sm:$0xff]
        %v212 = vld [vmem:[%s183 + $0x150] sm:$0xff]
        %v213 = vld [vmem:[%s183 + $0x158] sm:$0xff]
        %v214 = vld [vmem:[%s183 + $0x168] sm:$0xff]
        %v215 = vld [vmem:[%s183 + $0x170] sm:$0xff]
        %v216 = vld [vmem:[%s183 + $0x1] sm:$0xff]
        %v217 = vld [vmem:[%s183 + $0x9] sm:$0xff]
        %v218 = vld [vmem:[%s183 + $0x19] sm:$0xff]
        %v219 = vld [vmem:[%s183 + $0x21] sm:$0xff]
        %v220 = vld [vmem:[%s183 + $0x31] sm:$0xff]
        %v221 = vld [vmem:[%s183 + $0x39] sm:$0xff]
        %v222 = vld [vmem:[%s183 + $0x49] sm:$0xff]
        %v223 = vld [vmem:[%s183 + $0x51] sm:$0xff]
        %v224 = vld [vmem:[%s183 + $0x61] sm:$0xff]
        %v225 = vld [vmem:[%s183 + $0x69] sm:$0xff]
        %v226 = vld [vmem:[%s183 + $0x79] sm:$0xff]
        %v227 = vld [vmem:[%s183 + $0x81] sm:$0xff]
        %v228 = vld [vmem:[%s183 + $0x91] sm:$0xff]
        %v229 = vld [vmem:[%s183 + $0x99] sm:$0xff]
        %v230 = vld [vmem:[%s183 + $0xa9] sm:$0xff]
        %v231 = vld [vmem:[%s183 + $0xb1] sm:$0xff]
        %v232 = vld [vmem:[%s183 + $0xc1] sm:$0xff]
        %v233 = vld [vmem:[%s183 + $0xc9] sm:$0xff]
        %v234 = vld [vmem:[%s183 + $0xd9] sm:$0xff]
        %v235 = vld [vmem:[%s183 + $0xe1] sm:$0xff]
        %v236 = vld [vmem:[%s183 + $0xf1] sm:$0xff]
        %v237 = vld [vmem:[%s183 + $0xf9] sm:$0xff]
        %v238 = vld [vmem:[%s183 + $0x109] sm:$0xff]
        %v239 = vld [vmem:[%s183 + $0x111] sm:$0xff]
        %v240 = vld [vmem:[%s183 + $0x121] sm:$0xff]
        %v241 = vld [vmem:[%s183 + $0x129] sm:$0xff]
        %v242 = vld [vmem:[%s183 + $0x139] sm:$0xff]
        %v243 = vld [vmem:[%s183 + $0x141] sm:$0xff]
        %v244 = vld [vmem:[%s183 + $0x151] sm:$0xff]
        %v245 = vld [vmem:[%s183 + $0x159] sm:$0xff]
        %v246 = vld [vmem:[%s183 + $0x169] sm:$0xff]
        %v247 = vld [vmem:[%s183 + $0x171] sm:$0xff]
        %v248 = vld [vmem:[%s183 + $0x2] sm:$0xff]
        %v249 = vld [vmem:[%s183 + $0xa] sm:$0xff]
        %v250 = vld [vmem:[%s183 + $0x1a] sm:$0xff]
        %v251 = vld [vmem:[%s183 + $0x22] sm:$0xff]
        %v252 = vld [vmem:[%s183 + $0x32] sm:$0xff]
        %v253 = vld [vmem:[%s183 + $0x3a] sm:$0xff]
        %v254 = vld [vmem:[%s183 + $0x4a] sm:$0xff]
        %v255 = vld [vmem:[%s183 + $0x52] sm:$0xff]
        %v256 = vld [vmem:[%s183 + $0x62] sm:$0xff]
        %v257 = vld [vmem:[%s183 + $0x6a] sm:$0xff]
        %v258 = vld [vmem:[%s183 + $0x7a] sm:$0xff]
        %v259 = vld [vmem:[%s183 + $0x82] sm:$0xff]
        %v260 = vld [vmem:[%s183 + $0x92] sm:$0xff]
        %v261 = vld [vmem:[%s183 + $0x9a] sm:$0xff]
        %v262 = vld [vmem:[%s183 + $0xaa] sm:$0xff]
        %v263 = vld [vmem:[%s183 + $0xb2] sm:$0xff]
        %v264 = vld [vmem:[%s183 + $0xc2] sm:$0xff]
        %v265 = vld [vmem:[%s183 + $0xca] sm:$0xff]
        %v266 = vld [vmem:[%s183 + $0xda] sm:$0xff]
        %v267 = vld [vmem:[%s183 + $0xe2] sm:$0xff]
        %v268 = vld [vmem:[%s183 + $0xf2] sm:$0xff]
        %v269 = vld [vmem:[%s183 + $0xfa] sm:$0xff]
        %v270 = vld [vmem:[%s183 + $0x10a] sm:$0xff]
        %v271 = vld [vmem:[%s183 + $0x112] sm:$0xff]
        %v272 = vld [vmem:[%s183 + $0x122] sm:$0xff]
        %v273 = vld [vmem:[%s183 + $0x12a] sm:$0xff]
        %v274 = vld [vmem:[%s183 + $0x13a] sm:$0xff]
        %v275 = vld [vmem:[%s183 + $0x142] sm:$0xff]
        %v276 = vld [vmem:[%s183 + $0x152] sm:$0xff]
        %v277 = vld [vmem:[%s183 + $0x15a] sm:$0xff]
        %v278 = vld [vmem:[%s183 + $0x16a] sm:$0xff]
        %v279 = vld [vmem:[%s183 + $0x172] sm:$0xff]
        %s280 = scalar_lea.vmem %s183, 24
        %v281 = vld [vmem:[%s280] sm:$0xff]
        %v282 = vld [vmem:[%s280 + $0x8] sm:$0xff]
        %v283 = vld [vmem:[%s280 + $0x18] sm:$0xff]
        %v284 = vld [vmem:[%s280 + $0x20] sm:$0xff]
        %v285 = vld [vmem:[%s280 + $0x30] sm:$0xff]
        %v286 = vld [vmem:[%s280 + $0x38] sm:$0xff]
        %v287 = vld [vmem:[%s280 + $0x48] sm:$0xff]
        %v288 = vld [vmem:[%s280 + $0x50] sm:$0xff]
        %v289 = vld [vmem:[%s280 + $0x60] sm:$0xff]
        %v290 = vld [vmem:[%s280 + $0x68] sm:$0xff]
        %v291 = vld [vmem:[%s280 + $0x78] sm:$0xff]
        %v292 = vld [vmem:[%s280 + $0x80] sm:$0xff]
        %v293 = vld [vmem:[%s280 + $0x90] sm:$0xff]
        %v294 = vld [vmem:[%s280 + $0x98] sm:$0xff]
        %v295 = vld [vmem:[%s280 + $0xa8] sm:$0xff]
        %v296 = vld [vmem:[%s280 + $0xb0] sm:$0xff]
        %v297 = vld [vmem:[%s280 + $0xc0] sm:$0xff]
        %v298 = vld [vmem:[%s280 + $0xc8] sm:$0xff]
        %v299 = vld [vmem:[%s280 + $0xd8] sm:$0xff]
        %v300 = vld [vmem:[%s280 + $0xe0] sm:$0xff]
        %v301 = vld [vmem:[%s280 + $0xf0] sm:$0xff]
        %v302 = vld [vmem:[%s280 + $0xf8] sm:$0xff]
        %v303 = vld [vmem:[%s280 + $0x108] sm:$0xff]
        %v304 = vld [vmem:[%s280 + $0x110] sm:$0xff]
        %v305 = vld [vmem:[%s280 + $0x120] sm:$0xff]
        %v306 = vld [vmem:[%s280 + $0x128] sm:$0xff]
        %v307 = vld [vmem:[%s280 + $0x138] sm:$0xff]
        %v308 = vld [vmem:[%s280 + $0x140] sm:$0xff]
        %v309 = vld [vmem:[%s280 + $0x150] sm:$0xff]
        %v310 = vld [vmem:[%s280 + $0x158] sm:$0xff]
        %v311 = vld [vmem:[%s280 + $0x168] sm:$0xff]
        %v312 = vld [vmem:[%s280 + $0x170] sm:$0xff]
        %v313 = vld [vmem:[%s280 + $0x1] sm:$0xff]
        %v314 = vld [vmem:[%s280 + $0x9] sm:$0xff]
        %v315 = vld [vmem:[%s280 + $0x19] sm:$0xff]
        %v316 = vld [vmem:[%s280 + $0x21] sm:$0xff]
        %v317 = vld [vmem:[%s280 + $0x31] sm:$0xff]
        %v318 = vld [vmem:[%s280 + $0x39] sm:$0xff]
        %v319 = vld [vmem:[%s280 + $0x49] sm:$0xff]
        %v320 = vld [vmem:[%s280 + $0x51] sm:$0xff]
        %v321 = vld [vmem:[%s280 + $0x61] sm:$0xff]
        %v322 = vld [vmem:[%s280 + $0x69] sm:$0xff]
        %v323 = vld [vmem:[%s280 + $0x79] sm:$0xff]
        %v324 = vld [vmem:[%s280 + $0x81] sm:$0xff]
        %v325 = vld [vmem:[%s280 + $0x91] sm:$0xff]
        %v326 = vld [vmem:[%s280 + $0x99] sm:$0xff]
        %v327 = vld [vmem:[%s280 + $0xa9] sm:$0xff]
        %v328 = vld [vmem:[%s280 + $0xb1] sm:$0xff]
        %v329 = vld [vmem:[%s280 + $0xc1] sm:$0xff]
        %v330 = vld [vmem:[%s280 + $0xc9] sm:$0xff]
        %v331 = vld [vmem:[%s280 + $0xd9] sm:$0xff]
        %v332 = vld [vmem:[%s280 + $0xe1] sm:$0xff]
        %v333 = vld [vmem:[%s280 + $0xf1] sm:$0xff]
        %v334 = vld [vmem:[%s280 + $0xf9] sm:$0xff]
        %v335 = vld [vmem:[%s280 + $0x109] sm:$0xff]
        %v336 = vld [vmem:[%s280 + $0x111] sm:$0xff]
        %v337 = vld [vmem:[%s280 + $0x121] sm:$0xff]
        %v338 = vld [vmem:[%s280 + $0x129] sm:$0xff]
        %v339 = vld [vmem:[%s280 + $0x139] sm:$0xff]
        %v340 = vld [vmem:[%s280 + $0x141] sm:$0xff]
        %v341 = vld [vmem:[%s280 + $0x151] sm:$0xff]
        %v342 = vld [vmem:[%s280 + $0x159] sm:$0xff]
        %v343 = vld [vmem:[%s280 + $0x169] sm:$0xff]
        %v344 = vld [vmem:[%s280 + $0x171] sm:$0xff]
        %v345 = vld [vmem:[%s280 + $0x2] sm:$0xff]
        %v346 = vld [vmem:[%s280 + $0xa] sm:$0xff]
        %v347 = vld [vmem:[%s280 + $0x1a] sm:$0xff]
        %v348 = vld [vmem:[%s280 + $0x22] sm:$0xff]
        %v349 = vld [vmem:[%s280 + $0x32] sm:$0xff]
        %v350 = vld [vmem:[%s280 + $0x3a] sm:$0xff]
        %v351 = vld [vmem:[%s280 + $0x4a] sm:$0xff]
        %v352 = vld [vmem:[%s280 + $0x52] sm:$0xff]
        %v353 = vld [vmem:[%s280 + $0x62] sm:$0xff]
        %v354 = vld [vmem:[%s280 + $0x6a] sm:$0xff]
        %v355 = vld [vmem:[%s280 + $0x7a] sm:$0xff]
        %v356 = vld [vmem:[%s280 + $0x82] sm:$0xff]
        %v357 = vld [vmem:[%s280 + $0x92] sm:$0xff]
        %v358 = vld [vmem:[%s280 + $0x9a] sm:$0xff]
        %v359 = vld [vmem:[%s280 + $0xaa] sm:$0xff]
        %v360 = vld [vmem:[%s280 + $0xb2] sm:$0xff]
        %v361 = vld [vmem:[%s280 + $0xc2] sm:$0xff]
        %v362 = vld [vmem:[%s280 + $0xca] sm:$0xff]
        %v363 = vld [vmem:[%s280 + $0xda] sm:$0xff]
        %v364 = vld [vmem:[%s280 + $0xe2] sm:$0xff]
        %v365 = vld [vmem:[%s280 + $0xf2] sm:$0xff]
        %v366 = vld [vmem:[%s280 + $0xfa] sm:$0xff]
        %v367 = vld [vmem:[%s280 + $0x10a] sm:$0xff]
        %v368 = vld [vmem:[%s280 + $0x112] sm:$0xff]
        %v369 = vld [vmem:[%s280 + $0x122] sm:$0xff]
        %v370 = vld [vmem:[%s280 + $0x12a] sm:$0xff]
        %v371 = vld [vmem:[%s280 + $0x13a] sm:$0xff]
        %v372 = vld [vmem:[%s280 + $0x142] sm:$0xff]
        %v373 = vld [vmem:[%s280 + $0x152] sm:$0xff]
        %v374 = vld [vmem:[%s280 + $0x15a] sm:$0xff]
        %v375 = vld [vmem:[%s280 + $0x16a] sm:$0xff]
        %v376 = vld [vmem:[%s280 + $0x172] sm:$0xff]
        %s377 = scalar_lea.vmem %s183, 48
        %v378 = vld [vmem:[%s377] sm:$0xff]
        %v379 = vld [vmem:[%s377 + $0x8] sm:$0xff]
        %v380 = vld [vmem:[%s377 + $0x18] sm:$0xff]
        %v381 = vld [vmem:[%s377 + $0x20] sm:$0xff]
        %v382 = vld [vmem:[%s377 + $0x30] sm:$0xff]
        %v383 = vld [vmem:[%s377 + $0x38] sm:$0xff]
        %v384 = vld [vmem:[%s377 + $0x48] sm:$0xff]
        %v385 = vld [vmem:[%s377 + $0x50] sm:$0xff]
        %v386 = vld [vmem:[%s377 + $0x60] sm:$0xff]
        %v387 = vld [vmem:[%s377 + $0x68] sm:$0xff]
        %v388 = vld [vmem:[%s377 + $0x78] sm:$0xff]
        %v389 = vld [vmem:[%s377 + $0x80] sm:$0xff]
        %v390 = vld [vmem:[%s377 + $0x90] sm:$0xff]
        %v391 = vld [vmem:[%s377 + $0x98] sm:$0xff]
        %v392 = vld [vmem:[%s377 + $0xa8] sm:$0xff]
        %v393 = vld [vmem:[%s377 + $0xb0] sm:$0xff]
        %v394 = vld [vmem:[%s377 + $0xc0] sm:$0xff]
        %v395 = vld [vmem:[%s377 + $0xc8] sm:$0xff]
        %v396 = vld [vmem:[%s377 + $0xd8] sm:$0xff]
        %v397 = vld [vmem:[%s377 + $0xe0] sm:$0xff]
        %v398 = vld [vmem:[%s377 + $0xf0] sm:$0xff]
        %v399 = vld [vmem:[%s377 + $0xf8] sm:$0xff]
        %v400 = vld [vmem:[%s377 + $0x108] sm:$0xff]
        %v401 = vld [vmem:[%s377 + $0x110] sm:$0xff]
        %v402 = vld [vmem:[%s377 + $0x120] sm:$0xff]
        %v403 = vld [vmem:[%s377 + $0x128] sm:$0xff]
        %v404 = vld [vmem:[%s377 + $0x138] sm:$0xff]
        %v405 = vld [vmem:[%s377 + $0x140] sm:$0xff]
        %v406 = vld [vmem:[%s377 + $0x150] sm:$0xff]
        %v407 = vld [vmem:[%s377 + $0x158] sm:$0xff]
        %v408 = vld [vmem:[%s377 + $0x168] sm:$0xff]
        %v409 = vld [vmem:[%s377 + $0x170] sm:$0xff]
        %v410 = vld [vmem:[%s377 + $0x1] sm:$0xff]
        %v411 = vld [vmem:[%s377 + $0x9] sm:$0xff]
        %v412 = vld [vmem:[%s377 + $0x19] sm:$0xff]
        %v413 = vld [vmem:[%s377 + $0x21] sm:$0xff]
        %v414 = vld [vmem:[%s377 + $0x31] sm:$0xff]
        %v415 = vld [vmem:[%s377 + $0x39] sm:$0xff]
        %v416 = vld [vmem:[%s377 + $0x49] sm:$0xff]
        %v417 = vld [vmem:[%s377 + $0x51] sm:$0xff]
        %v418 = vld [vmem:[%s377 + $0x61] sm:$0xff]
        %v419 = vld [vmem:[%s377 + $0x69] sm:$0xff]
        %v420 = vld [vmem:[%s377 + $0x79] sm:$0xff]
        %v421 = vld [vmem:[%s377 + $0x81] sm:$0xff]
        %v422 = vld [vmem:[%s377 + $0x91] sm:$0xff]
        %v423 = vld [vmem:[%s377 + $0x99] sm:$0xff]
        %v424 = vld [vmem:[%s377 + $0xa9] sm:$0xff]
        %v425 = vld [vmem:[%s377 + $0xb1] sm:$0xff]
        %v426 = vld [vmem:[%s377 + $0xc1] sm:$0xff]
        %v427 = vld [vmem:[%s377 + $0xc9] sm:$0xff]
        %v428 = vld [vmem:[%s377 + $0xd9] sm:$0xff]
        %v429 = vld [vmem:[%s377 + $0xe1] sm:$0xff]
        %v430 = vld [vmem:[%s377 + $0xf1] sm:$0xff]
        %v431 = vld [vmem:[%s377 + $0xf9] sm:$0xff]
        %v432 = vld [vmem:[%s377 + $0x109] sm:$0xff]
        %v433 = vld [vmem:[%s377 + $0x111] sm:$0xff]
        %v434 = vld [vmem:[%s377 + $0x121] sm:$0xff]
        %v435 = vld [vmem:[%s377 + $0x129] sm:$0xff]
        %v436 = vld [vmem:[%s377 + $0x139] sm:$0xff]
        %v437 = vld [vmem:[%s377 + $0x141] sm:$0xff]
        %v438 = vld [vmem:[%s377 + $0x151] sm:$0xff]
        %v439 = vld [vmem:[%s377 + $0x159] sm:$0xff]
        %v440 = vld [vmem:[%s377 + $0x169] sm:$0xff]
        %v441 = vld [vmem:[%s377 + $0x171] sm:$0xff]
        %v442 = vld [vmem:[%s377 + $0x2] sm:$0xff]
        %v443 = vld [vmem:[%s377 + $0xa] sm:$0xff]
        %v444 = vld [vmem:[%s377 + $0x1a] sm:$0xff]
        %v445 = vld [vmem:[%s377 + $0x22] sm:$0xff]
        %v446 = vld [vmem:[%s377 + $0x32] sm:$0xff]
        %v447 = vld [vmem:[%s377 + $0x3a] sm:$0xff]
        %v448 = vld [vmem:[%s377 + $0x4a] sm:$0xff]
        %v449 = vld [vmem:[%s377 + $0x52] sm:$0xff]
        %v450 = vld [vmem:[%s377 + $0x62] sm:$0xff]
        %v451 = vld [vmem:[%s377 + $0x6a] sm:$0xff]
        %v452 = vld [vmem:[%s377 + $0x7a] sm:$0xff]
        %v453 = vld [vmem:[%s377 + $0x82] sm:$0xff]
        %v454 = vld [vmem:[%s377 + $0x92] sm:$0xff]
        %v455 = vld [vmem:[%s377 + $0x9a] sm:$0xff]
        %v456 = vld [vmem:[%s377 + $0xaa] sm:$0xff]
        %v457 = vld [vmem:[%s377 + $0xb2] sm:$0xff]
        %v458 = vld [vmem:[%s377 + $0xc2] sm:$0xff]
        %v459 = vld [vmem:[%s377 + $0xca] sm:$0xff]
        %v460 = vld [vmem:[%s377 + $0xda] sm:$0xff]
        %v461 = vld [vmem:[%s377 + $0xe2] sm:$0xff]
        %v462 = vld [vmem:[%s377 + $0xf2] sm:$0xff]
        %v463 = vld [vmem:[%s377 + $0xfa] sm:$0xff]
        %v464 = vld [vmem:[%s377 + $0x10a] sm:$0xff]
        %v465 = vld [vmem:[%s377 + $0x112] sm:$0xff]
        %v466 = vld [vmem:[%s377 + $0x122] sm:$0xff]
        %v467 = vld [vmem:[%s377 + $0x12a] sm:$0xff]
        %v468 = vld [vmem:[%s377 + $0x13a] sm:$0xff]
        %v469 = vld [vmem:[%s377 + $0x142] sm:$0xff]
        %v470 = vld [vmem:[%s377 + $0x152] sm:$0xff]
        %v471 = vld [vmem:[%s377 + $0x15a] sm:$0xff]
        %v472 = vld [vmem:[%s377 + $0x16a] sm:$0xff]
        %v473 = vld [vmem:[%s377 + $0x172] sm:$0xff]
        %506 = vrot.lane.b32.xlu0 %v216, 4
        %v507 = vpop.permute.xlu0 %506
        %508 = vrot.lane.b32.xlu0 %v217, 4
        %v509 = vpop.permute.xlu0 %508
        %510 = vrot.lane.b32.xlu0 %v218, 4
        %v511 = vpop.permute.xlu0 %510
        %512 = vrot.lane.b32.xlu0 %v219, 4
        %v513 = vpop.permute.xlu0 %512
        %514 = vrot.lane.b32.xlu0 %v220, 4
        %v515 = vpop.permute.xlu0 %514
        %516 = vrot.lane.b32.xlu0 %v221, 4
        %v517 = vpop.permute.xlu0 %516
        %518 = vrot.lane.b32.xlu0 %v222, 4
        %v519 = vpop.permute.xlu0 %518
        %520 = vrot.lane.b32.xlu0 %v223, 4
        %v521 = vpop.permute.xlu0 %520
        %522 = vrot.lane.b32.xlu0 %v224, 4
        %v523 = vpop.permute.xlu0 %522
        %524 = vrot.lane.b32.xlu0 %v225, 4
        %v525 = vpop.permute.xlu0 %524
        %526 = vrot.lane.b32.xlu0 %v226, 4
        %v527 = vpop.permute.xlu0 %526
        %528 = vrot.lane.b32.xlu0 %v227, 4
        %v529 = vpop.permute.xlu0 %528
        %530 = vrot.lane.b32.xlu0 %v228, 4
        %v531 = vpop.permute.xlu0 %530
        %532 = vrot.lane.b32.xlu0 %v229, 4
        %v533 = vpop.permute.xlu0 %532
        %534 = vrot.lane.b32.xlu0 %v230, 4
        %v535 = vpop.permute.xlu0 %534
        %536 = vrot.lane.b32.xlu0 %v231, 4
        %v537 = vpop.permute.xlu0 %536
        %538 = vrot.lane.b32.xlu0 %v232, 4
        %v539 = vpop.permute.xlu0 %538
        %540 = vrot.lane.b32.xlu0 %v233, 4
        %v541 = vpop.permute.xlu0 %540
        %542 = vrot.lane.b32.xlu0 %v234, 4
        %v543 = vpop.permute.xlu0 %542
        %544 = vrot.lane.b32.xlu0 %v235, 4
        %v545 = vpop.permute.xlu0 %544
        %546 = vrot.lane.b32.xlu0 %v236, 4
        %v547 = vpop.permute.xlu0 %546
        %548 = vrot.lane.b32.xlu0 %v237, 4
        %v549 = vpop.permute.xlu0 %548
        %550 = vrot.lane.b32.xlu0 %v238, 4
        %v551 = vpop.permute.xlu0 %550
        %552 = vrot.lane.b32.xlu0 %v239, 4
        %v553 = vpop.permute.xlu0 %552
        %554 = vrot.lane.b32.xlu0 %v240, 4
        %v555 = vpop.permute.xlu0 %554
        %556 = vrot.lane.b32.xlu0 %v241, 4
        %v557 = vpop.permute.xlu0 %556
        %558 = vrot.lane.b32.xlu0 %v242, 4
        %v559 = vpop.permute.xlu0 %558
        %560 = vrot.lane.b32.xlu0 %v243, 4
        %v561 = vpop.permute.xlu0 %560
        %562 = vrot.lane.b32.xlu0 %v244, 4
        %v563 = vpop.permute.xlu0 %562
        %564 = vrot.lane.b32.xlu0 %v245, 4
        %v565 = vpop.permute.xlu0 %564
        %566 = vrot.lane.b32.xlu0 %v246, 4
        %v567 = vpop.permute.xlu0 %566
        %568 = vrot.lane.b32.xlu0 %v247, 4
        %v569 = vpop.permute.xlu0 %568
        %634 = vrot.lane.b32.xlu0 %v248, 8
        %v635 = vpop.permute.xlu0 %634
        %636 = vrot.lane.b32.xlu0 %v249, 8
        %v637 = vpop.permute.xlu0 %636
        %638 = vrot.lane.b32.xlu0 %v250, 8
        %v639 = vpop.permute.xlu0 %638
        %640 = vrot.lane.b32.xlu0 %v251, 8
        %v641 = vpop.permute.xlu0 %640
        %642 = vrot.lane.b32.xlu0 %v252, 8
        %v643 = vpop.permute.xlu0 %642
        %644 = vrot.lane.b32.xlu0 %v253, 8
        %v645 = vpop.permute.xlu0 %644
        %646 = vrot.lane.b32.xlu0 %v254, 8
        %v647 = vpop.permute.xlu0 %646
        %648 = vrot.lane.b32.xlu0 %v255, 8
        %v649 = vpop.permute.xlu0 %648
        %650 = vrot.lane.b32.xlu0 %v256, 8
        %v651 = vpop.permute.xlu0 %650
        %652 = vrot.lane.b32.xlu0 %v257, 8
        %v653 = vpop.permute.xlu0 %652
        %654 = vrot.lane.b32.xlu0 %v258, 8
        %v655 = vpop.permute.xlu0 %654
        %656 = vrot.lane.b32.xlu0 %v259, 8
        %v657 = vpop.permute.xlu0 %656
        %658 = vrot.lane.b32.xlu0 %v260, 8
        %v659 = vpop.permute.xlu0 %658
        %660 = vrot.lane.b32.xlu0 %v261, 8
        %v661 = vpop.permute.xlu0 %660
        %662 = vrot.lane.b32.xlu0 %v262, 8
        %v663 = vpop.permute.xlu0 %662
        %664 = vrot.lane.b32.xlu0 %v263, 8
        %v665 = vpop.permute.xlu0 %664
        %666 = vrot.lane.b32.xlu0 %v264, 8
        %v667 = vpop.permute.xlu0 %666
        %668 = vrot.lane.b32.xlu0 %v265, 8
        %v669 = vpop.permute.xlu0 %668
        %670 = vrot.lane.b32.xlu0 %v266, 8
        %v671 = vpop.permute.xlu0 %670
        %672 = vrot.lane.b32.xlu0 %v267, 8
        %v673 = vpop.permute.xlu0 %672
        %674 = vrot.lane.b32.xlu0 %v268, 8
        %v675 = vpop.permute.xlu0 %674
        %676 = vrot.lane.b32.xlu0 %v269, 8
        %v677 = vpop.permute.xlu0 %676
        %678 = vrot.lane.b32.xlu0 %v270, 8
        %v679 = vpop.permute.xlu0 %678
        %680 = vrot.lane.b32.xlu0 %v271, 8
        %v681 = vpop.permute.xlu0 %680
        %682 = vrot.lane.b32.xlu0 %v272, 8
        %v683 = vpop.permute.xlu0 %682
        %684 = vrot.lane.b32.xlu0 %v273, 8
        %v685 = vpop.permute.xlu0 %684
        %686 = vrot.lane.b32.xlu0 %v274, 8
        %v687 = vpop.permute.xlu0 %686
        %688 = vrot.lane.b32.xlu0 %v275, 8
        %v689 = vpop.permute.xlu0 %688
        %690 = vrot.lane.b32.xlu0 %v276, 8
        %v691 = vpop.permute.xlu0 %690
        %692 = vrot.lane.b32.xlu0 %v277, 8
        %v693 = vpop.permute.xlu0 %692
        %694 = vrot.lane.b32.xlu0 %v278, 8
        %v695 = vpop.permute.xlu0 %694
        %696 = vrot.lane.b32.xlu0 %v279, 8
        %v697 = vpop.permute.xlu0 %696
        %762 = vrot.lane.b32.xlu0 %v281, 12
        %v763 = vpop.permute.xlu0 %762
        %764 = vrot.lane.b32.xlu0 %v282, 12
        %v765 = vpop.permute.xlu0 %764
        %766 = vrot.lane.b32.xlu0 %v283, 12
        %v767 = vpop.permute.xlu0 %766
        %768 = vrot.lane.b32.xlu0 %v284, 12
        %v769 = vpop.permute.xlu0 %768
        %770 = vrot.lane.b32.xlu0 %v285, 12
        %v771 = vpop.permute.xlu0 %770
        %772 = vrot.lane.b32.xlu0 %v286, 12
        %v773 = vpop.permute.xlu0 %772
        %774 = vrot.lane.b32.xlu0 %v287, 12
        %v775 = vpop.permute.xlu0 %774
        %776 = vrot.lane.b32.xlu0 %v288, 12
        %v777 = vpop.permute.xlu0 %776
        %778 = vrot.lane.b32.xlu0 %v289, 12
        %v779 = vpop.permute.xlu0 %778
        %780 = vrot.lane.b32.xlu0 %v290, 12
        %v781 = vpop.permute.xlu0 %780
        %782 = vrot.lane.b32.xlu0 %v291, 12
        %v783 = vpop.permute.xlu0 %782
        %784 = vrot.lane.b32.xlu0 %v292, 12
        %v785 = vpop.permute.xlu0 %784
        %786 = vrot.lane.b32.xlu0 %v293, 12
        %v787 = vpop.permute.xlu0 %786
        %788 = vrot.lane.b32.xlu0 %v294, 12
        %v789 = vpop.permute.xlu0 %788
        %790 = vrot.lane.b32.xlu0 %v295, 12
        %v791 = vpop.permute.xlu0 %790
        %792 = vrot.lane.b32.xlu0 %v296, 12
        %v793 = vpop.permute.xlu0 %792
        %794 = vrot.lane.b32.xlu0 %v297, 12
        %v795 = vpop.permute.xlu0 %794
        %796 = vrot.lane.b32.xlu0 %v298, 12
        %v797 = vpop.permute.xlu0 %796
        %798 = vrot.lane.b32.xlu0 %v299, 12
        %v799 = vpop.permute.xlu0 %798
        %800 = vrot.lane.b32.xlu0 %v300, 12
        %v801 = vpop.permute.xlu0 %800
        %802 = vrot.lane.b32.xlu0 %v301, 12
        %v803 = vpop.permute.xlu0 %802
        %804 = vrot.lane.b32.xlu0 %v302, 12
        %v805 = vpop.permute.xlu0 %804
        %806 = vrot.lane.b32.xlu0 %v303, 12
        %v807 = vpop.permute.xlu0 %806
        %808 = vrot.lane.b32.xlu0 %v304, 12
        %v809 = vpop.permute.xlu0 %808
        %810 = vrot.lane.b32.xlu0 %v305, 12
        %v811 = vpop.permute.xlu0 %810
        %812 = vrot.lane.b32.xlu0 %v306, 12
        %v813 = vpop.permute.xlu0 %812
        %814 = vrot.lane.b32.xlu0 %v307, 12
        %v815 = vpop.permute.xlu0 %814
        %816 = vrot.lane.b32.xlu0 %v308, 12
        %v817 = vpop.permute.xlu0 %816
        %818 = vrot.lane.b32.xlu0 %v309, 12
        %v819 = vpop.permute.xlu0 %818
        %820 = vrot.lane.b32.xlu0 %v310, 12
        %v821 = vpop.permute.xlu0 %820
        %822 = vrot.lane.b32.xlu0 %v311, 12
        %v823 = vpop.permute.xlu0 %822
        %824 = vrot.lane.b32.xlu0 %v312, 12
        %v825 = vpop.permute.xlu0 %824
        %890 = vrot.lane.b32.xlu0 %v313, 16
        %v891 = vpop.permute.xlu0 %890
        %892 = vrot.lane.b32.xlu0 %v314, 16
        %v893 = vpop.permute.xlu0 %892
        %894 = vrot.lane.b32.xlu0 %v315, 16
        %v895 = vpop.permute.xlu0 %894
        %896 = vrot.lane.b32.xlu0 %v316, 16
        %v897 = vpop.permute.xlu0 %896
        %898 = vrot.lane.b32.xlu0 %v317, 16
        %v899 = vpop.permute.xlu0 %898
        %900 = vrot.lane.b32.xlu0 %v318, 16
        %v901 = vpop.permute.xlu0 %900
        %902 = vrot.lane.b32.xlu0 %v319, 16
        %v903 = vpop.permute.xlu0 %902
        %904 = vrot.lane.b32.xlu0 %v320, 16
        %v905 = vpop.permute.xlu0 %904
        %906 = vrot.lane.b32.xlu0 %v321, 16
        %v907 = vpop.permute.xlu0 %906
        %908 = vrot.lane.b32.xlu0 %v322, 16
        %v909 = vpop.permute.xlu0 %908
        %910 = vrot.lane.b32.xlu0 %v323, 16
        %v911 = vpop.permute.xlu0 %910
        %912 = vrot.lane.b32.xlu0 %v324, 16
        %v913 = vpop.permute.xlu0 %912
        %914 = vrot.lane.b32.xlu0 %v325, 16
        %v915 = vpop.permute.xlu0 %914
        %916 = vrot.lane.b32.xlu0 %v326, 16
        %v917 = vpop.permute.xlu0 %916
        %918 = vrot.lane.b32.xlu0 %v327, 16
        %v919 = vpop.permute.xlu0 %918
        %920 = vrot.lane.b32.xlu0 %v328, 16
        %v921 = vpop.permute.xlu0 %920
        %922 = vrot.lane.b32.xlu0 %v329, 16
        %v923 = vpop.permute.xlu0 %922
        %924 = vrot.lane.b32.xlu0 %v330, 16
        %v925 = vpop.permute.xlu0 %924
        %926 = vrot.lane.b32.xlu0 %v331, 16
        %v927 = vpop.permute.xlu0 %926
        %928 = vrot.lane.b32.xlu0 %v332, 16
        %v929 = vpop.permute.xlu0 %928
        %930 = vrot.lane.b32.xlu0 %v333, 16
        %v931 = vpop.permute.xlu0 %930
        %932 = vrot.lane.b32.xlu0 %v334, 16
        %v933 = vpop.permute.xlu0 %932
        %934 = vrot.lane.b32.xlu0 %v335, 16
        %v935 = vpop.permute.xlu0 %934
        %936 = vrot.lane.b32.xlu0 %v336, 16
        %v937 = vpop.permute.xlu0 %936
        %938 = vrot.lane.b32.xlu0 %v337, 16
        %v939 = vpop.permute.xlu0 %938
        %940 = vrot.lane.b32.xlu0 %v338, 16
        %v941 = vpop.permute.xlu0 %940
        %942 = vrot.lane.b32.xlu0 %v339, 16
        %v943 = vpop.permute.xlu0 %942
        %944 = vrot.lane.b32.xlu0 %v340, 16
        %v945 = vpop.permute.xlu0 %944
        %946 = vrot.lane.b32.xlu0 %v341, 16
        %v947 = vpop.permute.xlu0 %946
        %948 = vrot.lane.b32.xlu0 %v342, 16
        %v949 = vpop.permute.xlu0 %948
        %950 = vrot.lane.b32.xlu0 %v343, 16
        %v951 = vpop.permute.xlu0 %950
        %952 = vrot.lane.b32.xlu0 %v344, 16
        %v953 = vpop.permute.xlu0 %952
        %1018 = vrot.lane.b32.xlu0 %v345, 20
        %v1019 = vpop.permute.xlu0 %1018
        %1020 = vrot.lane.b32.xlu0 %v346, 20
        %v1021 = vpop.permute.xlu0 %1020
        %1022 = vrot.lane.b32.xlu0 %v347, 20
        %v1023 = vpop.permute.xlu0 %1022
        %1024 = vrot.lane.b32.xlu0 %v348, 20
        %v1025 = vpop.permute.xlu0 %1024
        %1026 = vrot.lane.b32.xlu0 %v349, 20
        %v1027 = vpop.permute.xlu0 %1026
        %1028 = vrot.lane.b32.xlu0 %v350, 20
        %v1029 = vpop.permute.xlu0 %1028
        %1030 = vrot.lane.b32.xlu0 %v351, 20
        %v1031 = vpop.permute.xlu0 %1030
        %1032 = vrot.lane.b32.xlu0 %v352, 20
        %v1033 = vpop.permute.xlu0 %1032
        %1034 = vrot.lane.b32.xlu0 %v353, 20
        %v1035 = vpop.permute.xlu0 %1034
        %1036 = vrot.lane.b32.xlu0 %v354, 20
        %v1037 = vpop.permute.xlu0 %1036
        %1038 = vrot.lane.b32.xlu0 %v355, 20
        %v1039 = vpop.permute.xlu0 %1038
        %1040 = vrot.lane.b32.xlu0 %v356, 20
        %v1041 = vpop.permute.xlu0 %1040
        %1042 = vrot.lane.b32.xlu0 %v357, 20
        %v1043 = vpop.permute.xlu0 %1042
        %1044 = vrot.lane.b32.xlu0 %v358, 20
        %v1045 = vpop.permute.xlu0 %1044
        %1046 = vrot.lane.b32.xlu0 %v359, 20
        %v1047 = vpop.permute.xlu0 %1046
        %1048 = vrot.lane.b32.xlu0 %v360, 20
        %v1049 = vpop.permute.xlu0 %1048
        %1050 = vrot.lane.b32.xlu0 %v361, 20
        %v1051 = vpop.permute.xlu0 %1050
        %1052 = vrot.lane.b32.xlu0 %v362, 20
        %v1053 = vpop.permute.xlu0 %1052
        %1054 = vrot.lane.b32.xlu0 %v363, 20
        %v1055 = vpop.permute.xlu0 %1054
        %1056 = vrot.lane.b32.xlu0 %v364, 20
        %v1057 = vpop.permute.xlu0 %1056
        %1058 = vrot.lane.b32.xlu0 %v365, 20
        %v1059 = vpop.permute.xlu0 %1058
        %1060 = vrot.lane.b32.xlu0 %v366, 20
        %v1061 = vpop.permute.xlu0 %1060
        %1062 = vrot.lane.b32.xlu0 %v367, 20
        %v1063 = vpop.permute.xlu0 %1062
        %1064 = vrot.lane.b32.xlu0 %v368, 20
        %v1065 = vpop.permute.xlu0 %1064
        %1066 = vrot.lane.b32.xlu0 %v369, 20
        %v1067 = vpop.permute.xlu0 %1066
        %1068 = vrot.lane.b32.xlu0 %v370, 20
        %v1069 = vpop.permute.xlu0 %1068
        %1070 = vrot.lane.b32.xlu0 %v371, 20
        %v1071 = vpop.permute.xlu0 %1070
        %1072 = vrot.lane.b32.xlu0 %v372, 20
        %v1073 = vpop.permute.xlu0 %1072
        %1074 = vrot.lane.b32.xlu0 %v373, 20
        %v1075 = vpop.permute.xlu0 %1074
        %1076 = vrot.lane.b32.xlu0 %v374, 20
        %v1077 = vpop.permute.xlu0 %1076
        %1078 = vrot.lane.b32.xlu0 %v375, 20
        %v1079 = vpop.permute.xlu0 %1078
        %1080 = vrot.lane.b32.xlu0 %v376, 20
        %v1081 = vpop.permute.xlu0 %1080
        %1146 = vrot.lane.b32.xlu0 %v378, 24
        %v1147 = vpop.permute.xlu0 %1146
        %1148 = vrot.lane.b32.xlu0 %v379, 24
        %v1149 = vpop.permute.xlu0 %1148
        %1150 = vrot.lane.b32.xlu0 %v380, 24
        %v1151 = vpop.permute.xlu0 %1150
        %1152 = vrot.lane.b32.xlu0 %v381, 24
        %v1153 = vpop.permute.xlu0 %1152
        %1154 = vrot.lane.b32.xlu0 %v382, 24
        %v1155 = vpop.permute.xlu0 %1154
        %1156 = vrot.lane.b32.xlu0 %v383, 24
        %v1157 = vpop.permute.xlu0 %1156
        %1158 = vrot.lane.b32.xlu0 %v384, 24
        %v1159 = vpop.permute.xlu0 %1158
        %1160 = vrot.lane.b32.xlu0 %v385, 24
        %v1161 = vpop.permute.xlu0 %1160
        %1162 = vrot.lane.b32.xlu0 %v386, 24
        %v1163 = vpop.permute.xlu0 %1162
        %1164 = vrot.lane.b32.xlu0 %v387, 24
        %v1165 = vpop.permute.xlu0 %1164
        %1166 = vrot.lane.b32.xlu0 %v388, 24
        %v1167 = vpop.permute.xlu0 %1166
        %1168 = vrot.lane.b32.xlu0 %v389, 24
        %v1169 = vpop.permute.xlu0 %1168
        %1170 = vrot.lane.b32.xlu0 %v390, 24
        %v1171 = vpop.permute.xlu0 %1170
        %1172 = vrot.lane.b32.xlu0 %v391, 24
        %v1173 = vpop.permute.xlu0 %1172
        %1174 = vrot.lane.b32.xlu0 %v392, 24
        %v1175 = vpop.permute.xlu0 %1174
        %1176 = vrot.lane.b32.xlu0 %v393, 24
        %v1177 = vpop.permute.xlu0 %1176
        %1178 = vrot.lane.b32.xlu0 %v394, 24
        %v1179 = vpop.permute.xlu0 %1178
        %1180 = vrot.lane.b32.xlu0 %v395, 24
        %v1181 = vpop.permute.xlu0 %1180
        %1182 = vrot.lane.b32.xlu0 %v396, 24
        %v1183 = vpop.permute.xlu0 %1182
        %1184 = vrot.lane.b32.xlu0 %v397, 24
        %v1185 = vpop.permute.xlu0 %1184
        %1186 = vrot.lane.b32.xlu0 %v398, 24
        %v1187 = vpop.permute.xlu0 %1186
        %1188 = vrot.lane.b32.xlu0 %v399, 24
        %v1189 = vpop.permute.xlu0 %1188
        %1190 = vrot.lane.b32.xlu0 %v400, 24
        %v1191 = vpop.permute.xlu0 %1190
        %1192 = vrot.lane.b32.xlu0 %v401, 24
        %v1193 = vpop.permute.xlu0 %1192
        %1194 = vrot.lane.b32.xlu0 %v402, 24
        %v1195 = vpop.permute.xlu0 %1194
        %1196 = vrot.lane.b32.xlu0 %v403, 24
        %v1197 = vpop.permute.xlu0 %1196
        %1198 = vrot.lane.b32.xlu0 %v404, 24
        %v1199 = vpop.permute.xlu0 %1198
        %1200 = vrot.lane.b32.xlu0 %v405, 24
        %v1201 = vpop.permute.xlu0 %1200
        %1202 = vrot.lane.b32.xlu0 %v406, 24
        %v1203 = vpop.permute.xlu0 %1202
        %1204 = vrot.lane.b32.xlu0 %v407, 24
        %v1205 = vpop.permute.xlu0 %1204
        %1206 = vrot.lane.b32.xlu0 %v408, 24
        %v1207 = vpop.permute.xlu0 %1206
        %1208 = vrot.lane.b32.xlu0 %v409, 24
        %v1209 = vpop.permute.xlu0 %1208
        %1274 = vrot.lane.b32.xlu0 %v410, 28
        %v1275 = vpop.permute.xlu0 %1274
        %1276 = vrot.lane.b32.xlu0 %v411, 28
        %v1277 = vpop.permute.xlu0 %1276
        %1278 = vrot.lane.b32.xlu0 %v412, 28
        %v1279 = vpop.permute.xlu0 %1278
        %1280 = vrot.lane.b32.xlu0 %v413, 28
        %v1281 = vpop.permute.xlu0 %1280
        %1282 = vrot.lane.b32.xlu0 %v414, 28
        %v1283 = vpop.permute.xlu0 %1282
        %1284 = vrot.lane.b32.xlu0 %v415, 28
        %v1285 = vpop.permute.xlu0 %1284
        %1286 = vrot.lane.b32.xlu0 %v416, 28
        %v1287 = vpop.permute.xlu0 %1286
        %1288 = vrot.lane.b32.xlu0 %v417, 28
        %v1289 = vpop.permute.xlu0 %1288
        %1290 = vrot.lane.b32.xlu0 %v418, 28
        %v1291 = vpop.permute.xlu0 %1290
        %1292 = vrot.lane.b32.xlu0 %v419, 28
        %v1293 = vpop.permute.xlu0 %1292
        %1294 = vrot.lane.b32.xlu0 %v420, 28
        %v1295 = vpop.permute.xlu0 %1294
        %1296 = vrot.lane.b32.xlu0 %v421, 28
        %v1297 = vpop.permute.xlu0 %1296
        %1298 = vrot.lane.b32.xlu0 %v422, 28
        %v1299 = vpop.permute.xlu0 %1298
        %1300 = vrot.lane.b32.xlu0 %v423, 28
        %v1301 = vpop.permute.xlu0 %1300
        %1302 = vrot.lane.b32.xlu0 %v424, 28
        %v1303 = vpop.permute.xlu0 %1302
        %1304 = vrot.lane.b32.xlu0 %v425, 28
        %v1305 = vpop.permute.xlu0 %1304
        %1306 = vrot.lane.b32.xlu0 %v426, 28
        %v1307 = vpop.permute.xlu0 %1306
        %1308 = vrot.lane.b32.xlu0 %v427, 28
        %v1309 = vpop.permute.xlu0 %1308
        %1310 = vrot.lane.b32.xlu0 %v428, 28
        %v1311 = vpop.permute.xlu0 %1310
        %1312 = vrot.lane.b32.xlu0 %v429, 28
        %v1313 = vpop.permute.xlu0 %1312
        %1314 = vrot.lane.b32.xlu0 %v430, 28
        %v1315 = vpop.permute.xlu0 %1314
        %1316 = vrot.lane.b32.xlu0 %v431, 28
        %v1317 = vpop.permute.xlu0 %1316
        %1318 = vrot.lane.b32.xlu0 %v432, 28
        %v1319 = vpop.permute.xlu0 %1318
        %1320 = vrot.lane.b32.xlu0 %v433, 28
        %v1321 = vpop.permute.xlu0 %1320
        %1322 = vrot.lane.b32.xlu0 %v434, 28
        %v1323 = vpop.permute.xlu0 %1322
        %1324 = vrot.lane.b32.xlu0 %v435, 28
        %v1325 = vpop.permute.xlu0 %1324
        %1326 = vrot.lane.b32.xlu0 %v436, 28
        %v1327 = vpop.permute.xlu0 %1326
        %1328 = vrot.lane.b32.xlu0 %v437, 28
        %v1329 = vpop.permute.xlu0 %1328
        %1330 = vrot.lane.b32.xlu0 %v438, 28
        %v1331 = vpop.permute.xlu0 %1330
        %1332 = vrot.lane.b32.xlu0 %v439, 28
        %v1333 = vpop.permute.xlu0 %1332
        %1334 = vrot.lane.b32.xlu0 %v440, 28
        %v1335 = vpop.permute.xlu0 %1334
        %1336 = vrot.lane.b32.xlu0 %v441, 28
        %v1337 = vpop.permute.xlu0 %1336
        %1402 = vrot.lane.b32.xlu0 %v442, 32
        %v1403 = vpop.permute.xlu0 %1402
        %1404 = vrot.lane.b32.xlu0 %v443, 32
        %v1405 = vpop.permute.xlu0 %1404
        %1406 = vrot.lane.b32.xlu0 %v444, 32
        %v1407 = vpop.permute.xlu0 %1406
        %1408 = vrot.lane.b32.xlu0 %v445, 32
        %v1409 = vpop.permute.xlu0 %1408
        %1410 = vrot.lane.b32.xlu0 %v446, 32
        %v1411 = vpop.permute.xlu0 %1410
        %1412 = vrot.lane.b32.xlu0 %v447, 32
        %v1413 = vpop.permute.xlu0 %1412
        %1414 = vrot.lane.b32.xlu0 %v448, 32
        %v1415 = vpop.permute.xlu0 %1414
        %1416 = vrot.lane.b32.xlu0 %v449, 32
        %v1417 = vpop.permute.xlu0 %1416
        %1418 = vrot.lane.b32.xlu0 %v450, 32
        %v1419 = vpop.permute.xlu0 %1418
        %1420 = vrot.lane.b32.xlu0 %v451, 32
        %v1421 = vpop.permute.xlu0 %1420
        %1422 = vrot.lane.b32.xlu0 %v452, 32
        %v1423 = vpop.permute.xlu0 %1422
        %1424 = vrot.lane.b32.xlu0 %v453, 32
        %v1425 = vpop.permute.xlu0 %1424
        %1426 = vrot.lane.b32.xlu0 %v454, 32
        %v1427 = vpop.permute.xlu0 %1426
        %1428 = vrot.lane.b32.xlu0 %v455, 32
        %v1429 = vpop.permute.xlu0 %1428
        %1430 = vrot.lane.b32.xlu0 %v456, 32
        %v1431 = vpop.permute.xlu0 %1430
        %1432 = vrot.lane.b32.xlu0 %v457, 32
        %v1433 = vpop.permute.xlu0 %1432
        %1434 = vrot.lane.b32.xlu0 %v458, 32
        %v1435 = vpop.permute.xlu0 %1434
        %1436 = vrot.lane.b32.xlu0 %v459, 32
        %v1437 = vpop.permute.xlu0 %1436
        %1438 = vrot.lane.b32.xlu0 %v460, 32
        %v1439 = vpop.permute.xlu0 %1438
        %1440 = vrot.lane.b32.xlu0 %v461, 32
        %v1441 = vpop.permute.xlu0 %1440
        %1442 = vrot.lane.b32.xlu0 %v462, 32
        %v1443 = vpop.permute.xlu0 %1442
        %1444 = vrot.lane.b32.xlu0 %v463, 32
        %v1445 = vpop.permute.xlu0 %1444
        %1446 = vrot.lane.b32.xlu0 %v464, 32
        %v1447 = vpop.permute.xlu0 %1446
        %1448 = vrot.lane.b32.xlu0 %v465, 32
        %v1449 = vpop.permute.xlu0 %1448
        %1450 = vrot.lane.b32.xlu0 %v466, 32
        %v1451 = vpop.permute.xlu0 %1450
        %1452 = vrot.lane.b32.xlu0 %v467, 32
        %v1453 = vpop.permute.xlu0 %1452
        %1454 = vrot.lane.b32.xlu0 %v468, 32
        %v1455 = vpop.permute.xlu0 %1454
        %1456 = vrot.lane.b32.xlu0 %v469, 32
        %v1457 = vpop.permute.xlu0 %1456
        %1458 = vrot.lane.b32.xlu0 %v470, 32
        %v1459 = vpop.permute.xlu0 %1458
        %1460 = vrot.lane.b32.xlu0 %v471, 32
        %v1461 = vpop.permute.xlu0 %1460
        %1462 = vrot.lane.b32.xlu0 %v472, 32
        %v1463 = vpop.permute.xlu0 %1462
        %1464 = vrot.lane.b32.xlu0 %v473, 32
        %v1465 = vpop.permute.xlu0 %1464
        %vm1498 = vcmask 31744
        %v1499 = vsel %vm1498, %v184, %v507
        %v1500 = vsel %vm1498, %v185, %v509
        %v1501 = vsel %vm1498, %v186, %v511
        %v1502 = vsel %vm1498, %v187, %v513
        %v1503 = vsel %vm1498, %v188, %v515
        %v1504 = vsel %vm1498, %v189, %v517
        %v1505 = vsel %vm1498, %v190, %v519
        %v1506 = vsel %vm1498, %v191, %v521
        %v1507 = vsel %vm1498, %v192, %v523
        %v1508 = vsel %vm1498, %v193, %v525
        %v1509 = vsel %vm1498, %v194, %v527
        %v1510 = vsel %vm1498, %v195, %v529
        %v1511 = vsel %vm1498, %v196, %v531
        %v1512 = vsel %vm1498, %v197, %v533
        %v1513 = vsel %vm1498, %v198, %v535
        %v1514 = vsel %vm1498, %v199, %v537
        %v1515 = vsel %vm1498, %v200, %v539
        %v1516 = vsel %vm1498, %v201, %v541
        %v1517 = vsel %vm1498, %v202, %v543
        %v1518 = vsel %vm1498, %v203, %v545
        %v1519 = vsel %vm1498, %v204, %v547
        %v1520 = vsel %vm1498, %v205, %v549
        %v1521 = vsel %vm1498, %v206, %v551
        %v1522 = vsel %vm1498, %v207, %v553
        %v1523 = vsel %vm1498, %v208, %v555
        %v1524 = vsel %vm1498, %v209, %v557
        %v1525 = vsel %vm1498, %v210, %v559
        %v1526 = vsel %vm1498, %v211, %v561
        %v1527 = vsel %vm1498, %v212, %v563
        %v1528 = vsel %vm1498, %v213, %v565
        %v1529 = vsel %vm1498, %v214, %v567
        %v1530 = vsel %vm1498, %v215, %v569
        %vm1531 = vcmask 64512
        %v1532 = vsel %vm1531, %v1499, %v635
        %v1533 = vsel %vm1531, %v1500, %v637
        %v1534 = vsel %vm1531, %v1501, %v639
        %v1535 = vsel %vm1531, %v1502, %v641
        %v1536 = vsel %vm1531, %v1503, %v643
        %v1537 = vsel %vm1531, %v1504, %v645
        %v1538 = vsel %vm1531, %v1505, %v647
        %v1539 = vsel %vm1531, %v1506, %v649
        %v1540 = vsel %vm1531, %v1507, %v651
        %v1541 = vsel %vm1531, %v1508, %v653
        %v1542 = vsel %vm1531, %v1509, %v655
        %v1543 = vsel %vm1531, %v1510, %v657
        %v1544 = vsel %vm1531, %v1511, %v659
        %v1545 = vsel %vm1531, %v1512, %v661
        %v1546 = vsel %vm1531, %v1513, %v663
        %v1547 = vsel %vm1531, %v1514, %v665
        %v1548 = vsel %vm1531, %v1515, %v667
        %v1549 = vsel %vm1531, %v1516, %v669
        %v1550 = vsel %vm1531, %v1517, %v671
        %v1551 = vsel %vm1531, %v1518, %v673
        %v1552 = vsel %vm1531, %v1519, %v675
        %v1553 = vsel %vm1531, %v1520, %v677
        %v1554 = vsel %vm1531, %v1521, %v679
        %v1555 = vsel %vm1531, %v1522, %v681
        %v1556 = vsel %vm1531, %v1523, %v683
        %v1557 = vsel %vm1531, %v1524, %v685
        %v1558 = vsel %vm1531, %v1525, %v687
        %v1559 = vsel %vm1531, %v1526, %v689
        %v1560 = vsel %vm1531, %v1527, %v691
        %v1561 = vsel %vm1531, %v1528, %v693
        %v1562 = vsel %vm1531, %v1529, %v695
        %v1563 = vsel %vm1531, %v1530, %v697
        %vm1564 = vcmask 97280
        %v1565 = vsel %vm1564, %v1532, %v763
        %v1566 = vsel %vm1564, %v1533, %v765
        %v1567 = vsel %vm1564, %v1534, %v767
        %v1568 = vsel %vm1564, %v1535, %v769
        %v1569 = vsel %vm1564, %v1536, %v771
        %v1570 = vsel %vm1564, %v1537, %v773
        %v1571 = vsel %vm1564, %v1538, %v775
        %v1572 = vsel %vm1564, %v1539, %v777
        %v1573 = vsel %vm1564, %v1540, %v779
        %v1574 = vsel %vm1564, %v1541, %v781
        %v1575 = vsel %vm1564, %v1542, %v783
        %v1576 = vsel %vm1564, %v1543, %v785
        %v1577 = vsel %vm1564, %v1544, %v787
        %v1578 = vsel %vm1564, %v1545, %v789
        %v1579 = vsel %vm1564, %v1546, %v791
        %v1580 = vsel %vm1564, %v1547, %v793
        %v1581 = vsel %vm1564, %v1548, %v795
        %v1582 = vsel %vm1564, %v1549, %v797
        %v1583 = vsel %vm1564, %v1550, %v799
        %v1584 = vsel %vm1564, %v1551, %v801
        %v1585 = vsel %vm1564, %v1552, %v803
        %v1586 = vsel %vm1564, %v1553, %v805
        %v1587 = vsel %vm1564, %v1554, %v807
        %v1588 = vsel %vm1564, %v1555, %v809
        %v1589 = vsel %vm1564, %v1556, %v811
        %v1590 = vsel %vm1564, %v1557, %v813
        %v1591 = vsel %vm1564, %v1558, %v815
        %v1592 = vsel %vm1564, %v1559, %v817
        %v1593 = vsel %vm1564, %v1560, %v819
        %v1594 = vsel %vm1564, %v1561, %v821
        %v1595 = vsel %vm1564, %v1562, %v823
        %v1596 = vsel %vm1564, %v1563, %v825
        %vm1597 = vcmask 130048
        %v1598 = vsel %vm1597, %v1565, %v891
        %v1599 = vsel %vm1597, %v1566, %v893
        %v1600 = vsel %vm1597, %v1567, %v895
        %v1601 = vsel %vm1597, %v1568, %v897
        %v1602 = vsel %vm1597, %v1569, %v899
        %v1603 = vsel %vm1597, %v1570, %v901
        %v1604 = vsel %vm1597, %v1571, %v903
        %v1605 = vsel %vm1597, %v1572, %v905
        %v1606 = vsel %vm1597, %v1573, %v907
        %v1607 = vsel %vm1597, %v1574, %v909
        %v1608 = vsel %vm1597, %v1575, %v911
        %v1609 = vsel %vm1597, %v1576, %v913
        %v1610 = vsel %vm1597, %v1577, %v915
        %v1611 = vsel %vm1597, %v1578, %v917
        %v1612 = vsel %vm1597, %v1579, %v919
        %v1613 = vsel %vm1597, %v1580, %v921
        %v1614 = vsel %vm1597, %v1581, %v923
        %v1615 = vsel %vm1597, %v1582, %v925
        %v1616 = vsel %vm1597, %v1583, %v927
        %v1617 = vsel %vm1597, %v1584, %v929
        %v1618 = vsel %vm1597, %v1585, %v931
        %v1619 = vsel %vm1597, %v1586, %v933
        %v1620 = vsel %vm1597, %v1587, %v935
        %v1621 = vsel %vm1597, %v1588, %v937
        %v1622 = vsel %vm1597, %v1589, %v939
        %v1623 = vsel %vm1597, %v1590, %v941
        %v1624 = vsel %vm1597, %v1591, %v943
        %v1625 = vsel %vm1597, %v1592, %v945
        %v1626 = vsel %vm1597, %v1593, %v947
        %v1627 = vsel %vm1597, %v1594, %v949
        %v1628 = vsel %vm1597, %v1595, %v951
        %v1629 = vsel %vm1597, %v1596, %v953
        %vm1630 = vcmask 162816
        %v1631 = vsel %vm1630, %v1598, %v1019
        %v1632 = vsel %vm1630, %v1599, %v1021
        %v1633 = vsel %vm1630, %v1600, %v1023
        %v1634 = vsel %vm1630, %v1601, %v1025
        %v1635 = vsel %vm1630, %v1602, %v1027
        %v1636 = vsel %vm1630, %v1603, %v1029
        %v1637 = vsel %vm1630, %v1604, %v1031
        %v1638 = vsel %vm1630, %v1605, %v1033
        %v1639 = vsel %vm1630, %v1606, %v1035
        %v1640 = vsel %vm1630, %v1607, %v1037
        %v1641 = vsel %vm1630, %v1608, %v1039
        %v1642 = vsel %vm1630, %v1609, %v1041
        %v1643 = vsel %vm1630, %v1610, %v1043
        %v1644 = vsel %vm1630, %v1611, %v1045
        %v1645 = vsel %vm1630, %v1612, %v1047
        %v1646 = vsel %vm1630, %v1613, %v1049
        %v1647 = vsel %vm1630, %v1614, %v1051
        %v1648 = vsel %vm1630, %v1615, %v1053
        %v1649 = vsel %vm1630, %v1616, %v1055
        %v1650 = vsel %vm1630, %v1617, %v1057
        %v1651 = vsel %vm1630, %v1618, %v1059
        %v1652 = vsel %vm1630, %v1619, %v1061
        %v1653 = vsel %vm1630, %v1620, %v1063
        %v1654 = vsel %vm1630, %v1621, %v1065
        %v1655 = vsel %vm1630, %v1622, %v1067
        %v1656 = vsel %vm1630, %v1623, %v1069
        %v1657 = vsel %vm1630, %v1624, %v1071
        %v1658 = vsel %vm1630, %v1625, %v1073
        %v1659 = vsel %vm1630, %v1626, %v1075
        %v1660 = vsel %vm1630, %v1627, %v1077
        %v1661 = vsel %vm1630, %v1628, %v1079
        %v1662 = vsel %vm1630, %v1629, %v1081
        %vm1663 = vcmask 195584
        %v1664 = vsel %vm1663, %v1631, %v1147
        %v1665 = vsel %vm1663, %v1632, %v1149
        %v1666 = vsel %vm1663, %v1633, %v1151
        %v1667 = vsel %vm1663, %v1634, %v1153
        %v1668 = vsel %vm1663, %v1635, %v1155
        %v1669 = vsel %vm1663, %v1636, %v1157
        %v1670 = vsel %vm1663, %v1637, %v1159
        %v1671 = vsel %vm1663, %v1638, %v1161
        %v1672 = vsel %vm1663, %v1639, %v1163
        %v1673 = vsel %vm1663, %v1640, %v1165
        %v1674 = vsel %vm1663, %v1641, %v1167
        %v1675 = vsel %vm1663, %v1642, %v1169
        %v1676 = vsel %vm1663, %v1643, %v1171
        %v1677 = vsel %vm1663, %v1644, %v1173
        %v1678 = vsel %vm1663, %v1645, %v1175
        %v1679 = vsel %vm1663, %v1646, %v1177
        %v1680 = vsel %vm1663, %v1647, %v1179
        %v1681 = vsel %vm1663, %v1648, %v1181
        %v1682 = vsel %vm1663, %v1649, %v1183
        %v1683 = vsel %vm1663, %v1650, %v1185
        %v1684 = vsel %vm1663, %v1651, %v1187
        %v1685 = vsel %vm1663, %v1652, %v1189
        %v1686 = vsel %vm1663, %v1653, %v1191
        %v1687 = vsel %vm1663, %v1654, %v1193
        %v1688 = vsel %vm1663, %v1655, %v1195
        %v1689 = vsel %vm1663, %v1656, %v1197
        %v1690 = vsel %vm1663, %v1657, %v1199
        %v1691 = vsel %vm1663, %v1658, %v1201
        %v1692 = vsel %vm1663, %v1659, %v1203
        %v1693 = vsel %vm1663, %v1660, %v1205
        %v1694 = vsel %vm1663, %v1661, %v1207
        %v1695 = vsel %vm1663, %v1662, %v1209
        %vm1696 = vcmask 228352
        %v1697 = vsel %vm1696, %v1664, %v1275
        %v1698 = vsel %vm1696, %v1665, %v1277
        %v1699 = vsel %vm1696, %v1666, %v1279
        %v1700 = vsel %vm1696, %v1667, %v1281
        %v1701 = vsel %vm1696, %v1668, %v1283
        %v1702 = vsel %vm1696, %v1669, %v1285
        %v1703 = vsel %vm1696, %v1670, %v1287
        %v1704 = vsel %vm1696, %v1671, %v1289
        %v1705 = vsel %vm1696, %v1672, %v1291
        %v1706 = vsel %vm1696, %v1673, %v1293
        %v1707 = vsel %vm1696, %v1674, %v1295
        %v1708 = vsel %vm1696, %v1675, %v1297
        %v1709 = vsel %vm1696, %v1676, %v1299
        %v1710 = vsel %vm1696, %v1677, %v1301
        %v1711 = vsel %vm1696, %v1678, %v1303
        %v1712 = vsel %vm1696, %v1679, %v1305
        %v1713 = vsel %vm1696, %v1680, %v1307
        %v1714 = vsel %vm1696, %v1681, %v1309
        %v1715 = vsel %vm1696, %v1682, %v1311
        %v1716 = vsel %vm1696, %v1683, %v1313
        %v1717 = vsel %vm1696, %v1684, %v1315
        %v1718 = vsel %vm1696, %v1685, %v1317
        %v1719 = vsel %vm1696, %v1686, %v1319
        %v1720 = vsel %vm1696, %v1687, %v1321
        %v1721 = vsel %vm1696, %v1688, %v1323
        %v1722 = vsel %vm1696, %v1689, %v1325
        %v1723 = vsel %vm1696, %v1690, %v1327
        %v1724 = vsel %vm1696, %v1691, %v1329
        %v1725 = vsel %vm1696, %v1692, %v1331
        %v1726 = vsel %vm1696, %v1693, %v1333
        %v1727 = vsel %vm1696, %v1694, %v1335
        %v1728 = vsel %vm1696, %v1695, %v1337
        %vm1729 = vcmask 261120
        %v1730 = vsel %vm1729, %v1697, %v1403
        %v1731 = vsel %vm1729, %v1698, %v1405
        %v1732 = vsel %vm1729, %v1699, %v1407
        %v1733 = vsel %vm1729, %v1700, %v1409
        %v1734 = vsel %vm1729, %v1701, %v1411
        %v1735 = vsel %vm1729, %v1702, %v1413
        %v1736 = vsel %vm1729, %v1703, %v1415
        %v1737 = vsel %vm1729, %v1704, %v1417
        %v1738 = vsel %vm1729, %v1705, %v1419
        %v1739 = vsel %vm1729, %v1706, %v1421
        %v1740 = vsel %vm1729, %v1707, %v1423
        %v1741 = vsel %vm1729, %v1708, %v1425
        %v1742 = vsel %vm1729, %v1709, %v1427
        %v1743 = vsel %vm1729, %v1710, %v1429
        %v1744 = vsel %vm1729, %v1711, %v1431
        %v1745 = vsel %vm1729, %v1712, %v1433
        %v1746 = vsel %vm1729, %v1713, %v1435
        %v1747 = vsel %vm1729, %v1714, %v1437
        %v1748 = vsel %vm1729, %v1715, %v1439
        %v1749 = vsel %vm1729, %v1716, %v1441
        %v1750 = vsel %vm1729, %v1717, %v1443
        %v1751 = vsel %vm1729, %v1718, %v1445
        %v1752 = vsel %vm1729, %v1719, %v1447
        %v1753 = vsel %vm1729, %v1720, %v1449
        %v1754 = vsel %vm1729, %v1721, %v1451
        %v1755 = vsel %vm1729, %v1722, %v1453
        %v1756 = vsel %vm1729, %v1723, %v1455
        %v1757 = vsel %vm1729, %v1724, %v1457
        %v1758 = vsel %vm1729, %v1725, %v1459
        %v1759 = vsel %vm1729, %v1726, %v1461
        %v1760 = vsel %vm1729, %v1727, %v1463
        %v1761 = vsel %vm1729, %v1728, %v1465
        %vm1762 = vcmask 293888
        %v1763 = vsel %vm1762, %v1730, 0.0
        %v1764 = vsel %vm1762, %v1731, 0.0
        %v1765 = vsel %vm1762, %v1732, 0.0
        %v1766 = vsel %vm1762, %v1733, 0.0
        %v1767 = vsel %vm1762, %v1734, 0.0
        %v1768 = vsel %vm1762, %v1735, 0.0
        %v1769 = vsel %vm1762, %v1736, 0.0
        %v1770 = vsel %vm1762, %v1737, 0.0
        %v1771 = vsel %vm1762, %v1738, 0.0
        %v1772 = vsel %vm1762, %v1739, 0.0
        %v1773 = vsel %vm1762, %v1740, 0.0
        %v1774 = vsel %vm1762, %v1741, 0.0
        %v1775 = vsel %vm1762, %v1742, 0.0
        %v1776 = vsel %vm1762, %v1743, 0.0
        %v1777 = vsel %vm1762, %v1744, 0.0
        %v1778 = vsel %vm1762, %v1745, 0.0
        %v1779 = vsel %vm1762, %v1746, 0.0
        %v1780 = vsel %vm1762, %v1747, 0.0
        %v1781 = vsel %vm1762, %v1748, 0.0
        %v1782 = vsel %vm1762, %v1749, 0.0
        %v1783 = vsel %vm1762, %v1750, 0.0
        %v1784 = vsel %vm1762, %v1751, 0.0
        %v1785 = vsel %vm1762, %v1752, 0.0
        %v1786 = vsel %vm1762, %v1753, 0.0
        %v1787 = vsel %vm1762, %v1754, 0.0
        %v1788 = vsel %vm1762, %v1755, 0.0
        %v1789 = vsel %vm1762, %v1756, 0.0
        %v1790 = vsel %vm1762, %v1757, 0.0
        %v1791 = vsel %vm1762, %v1758, 0.0
        %v1792 = vsel %vm1762, %v1759, 0.0
        %v1793 = vsel %vm1762, %v1760, 0.0
        %v1794 = vsel %vm1762, %v1761, 0.0
        %v1795 = vld [vmem:[%s1] sm:$0xff]
        %v1796 = vld [vmem:[%s1 + $0x8] sm:$0xff]
        %v1797 = vld [vmem:[%s1 + $0x10] sm:$0xff]
        %v1798 = vld [vmem:[%s1 + $0x18] sm:$0xff]
        %v1799 = vld [vmem:[%s1 + $0x20] sm:$0xff]
        %v1800 = vld [vmem:[%s1 + $0x28] sm:$0xff]
        %v1801 = vld [vmem:[%s1 + $0x30] sm:$0xff]
        %v1802 = vld [vmem:[%s1 + $0x38] sm:$0xff]
        %v1803 = vld [vmem:[%s1 + $0x40] sm:$0xff]
        %v1804 = vld [vmem:[%s1 + $0x48] sm:$0xff]
        %v1805 = vld [vmem:[%s1 + $0x50] sm:$0xff]
        %v1806 = vld [vmem:[%s1 + $0x58] sm:$0xff]
        %v1807 = vld [vmem:[%s1 + $0x60] sm:$0xff]
        %v1808 = vld [vmem:[%s1 + $0x68] sm:$0xff]
        %v1809 = vld [vmem:[%s1 + $0x70] sm:$0xff]
        %v1810 = vld [vmem:[%s1 + $0x78] sm:$0xff]
        %1811 = vmatprep.subr.mxu0 0.0
        %1812 = vmatpush1.msra.mxu0 %v1795
        %1813 = vmatprep.subr.mxu0 0.0
        %1814 = vmatpush1.msra.mxu0 %v1796
        %1815 = vmatprep.subr.mxu0 0.0
        %1816 = vmatpush1.msra.mxu0 %v1797
        %1817 = vmatprep.subr.mxu0 0.0
        %1818 = vmatpush1.msra.mxu0 %v1798
        %1819 = vmatprep.subr.mxu0 0.0
        %1820 = vmatpush1.msra.mxu0 %v1799
        %1821 = vmatprep.subr.mxu0 0.0
        %1822 = vmatpush1.msra.mxu0 %v1800
        %1823 = vmatprep.subr.mxu0 0.0
        %1824 = vmatpush1.msra.mxu0 %v1801
        %1825 = vmatprep.subr.mxu0 0.0
        %1826 = vmatpush1.msra.mxu0 %v1802
        %1827 = vmatprep.subr.mxu0 0.0
        %1828 = vmatpush1.msra.mxu0 %v1803
        %1829 = vmatprep.subr.mxu0 0.0
        %1830 = vmatpush1.msra.mxu0 %v1804
        %1831 = vmatprep.subr.mxu0 0.0
        %1832 = vmatpush1.msra.mxu0 %v1805
        %1833 = vmatprep.subr.mxu0 0.0
        %1834 = vmatpush1.msra.mxu0 %v1806
        %1835 = vmatprep.subr.mxu0 0.0
        %1836 = vmatpush1.msra.mxu0 %v1807
        %1837 = vmatprep.subr.mxu0 0.0
        %1838 = vmatpush1.msra.mxu0 %v1808
        %1839 = vmatprep.subr.mxu0 0.0
        %1840 = vmatpush1.msra.mxu0 %v1809
        %1841 = vmatprep.subr.mxu0 0.0
        %1842 = vmatpush1.msra.mxu0 %v1810
        %1843 = vmatprep.subr.mxu0 0.0
        %1844 = vmatpush1.msra.mxu0 0.0
        %1845 = vmatprep.subr.mxu0 0.0
        %1846 = vmatpush1.msra.mxu0 0.0
        %1847 = vmatprep.subr.mxu0 0.0
        %1848 = vmatpush1.msra.mxu0 0.0
        %1849 = vmatprep.subr.mxu0 0.0
        %1850 = vmatpush1.msra.mxu0 0.0
        %1851 = vmatprep.subr.mxu0 0.0
        %1852 = vmatpush1.msra.mxu0 0.0
        %1853 = vmatprep.subr.mxu0 0.0
        %1854 = vmatpush1.msra.mxu0 0.0
        %1855 = vmatprep.subr.mxu0 0.0
        %1856 = vmatpush1.msra.mxu0 0.0
        %1857 = vmatprep.subr.mxu0 0.0
        %1858 = vmatpush1.msra.mxu0 0.0
        %1859 = vmatprep.subr.mxu0 0.0
        %1860 = vmatpush1.msra.mxu0 0.0
        %1861 = vmatprep.subr.mxu0 0.0
        %1862 = vmatpush1.msra.mxu0 0.0
        %1863 = vmatprep.subr.mxu0 0.0
        %1864 = vmatpush1.msra.mxu0 0.0
        %1865 = vmatprep.subr.mxu0 0.0
        %1866 = vmatpush1.msra.mxu0 0.0
        %1867 = vmatprep.subr.mxu0 0.0
        %1868 = vmatpush1.msra.mxu0 0.0
        %1869 = vmatprep.subr.mxu0 0.0
        %1870 = vmatpush1.msra.mxu0 0.0
        %1871 = vmatprep.subr.mxu0 0.0
        %1872 = vmatpush1.msra.mxu0 0.0
        %1873 = vmatprep.subr.mxu0 0.0
        %1874 = vmatpush1.msra.mxu0 0.0
        %1875 = vmatprep.mubr.f32.mxu0 0.0
        %1876 = vmatmul.mubr.f32.gmra.mrb[0].mxu0 %v1763
        %v1877 = vpop.f32.mrb[0].mxu0
        %v1878 = vadd.f32 0.0, %v1877
        %v1879 = vpop.f32.mrb[0].mxu0
        %1880 = vmatprep.mubr.f32.mxu0 0.0
        %1881 = vmatmul.mubr.f32.gmra.mrb[0].mxu0 %v1764
        %v1882 = vpop.f32.mrb[0].mxu0
        %v1883 = vadd.f32 0.0, %v1882
        %v1884 = vpop.f32.mrb[0].mxu0
        %1885 = vmatprep.mubr.f32.mxu0 0.0
        %1886 = vmatmul.mubr.f32.gmra.mrb[0].mxu0 %v1765
        %v1887 = vpop.f32.mrb[0].mxu0
        %v1888 = vadd.f32 0.0, %v1887
        %v1889 = vpop.f32.mrb[0].mxu0
        %1890 = vmatprep.mubr.f32.mxu0 0.0
        %1891 = vmatmul.mubr.f32.gmra.mrb[0].mxu0 %v1766
        %v1892 = vpop.f32.mrb[0].mxu0
        %v1893 = vadd.f32 0.0, %v1892
        %v1894 = vpop.f32.mrb[0].mxu0
        %1895 = vmatprep.mubr.f32.mxu0 0.0
        %1896 = vmatmul.mubr.f32.gmra.mrb[0].mxu0 %v1767
        %v1897 = vpop.f32.mrb[0].mxu0
        %v1898 = vadd.f32 0.0, %v1897
        %v1899 = vpop.f32.mrb[0].mxu0
        %1900 = vmatprep.mubr.f32.mxu0 0.0
        %1901 = vmatmul.mubr.f32.gmra.mrb[0].mxu0 %v1768
        %v1902 = vpop.f32.mrb[0].mxu0
        %v1903 = vadd.f32 0.0, %v1902
        %v1904 = vpop.f32.mrb[0].mxu0
        %1905 = vmatprep.mubr.f32.mxu0 0.0
        %1906 = vmatmul.mubr.f32.gmra.mrb[0].mxu0 %v1769
        %v1907 = vpop.f32.mrb[0].mxu0
        %v1908 = vadd.f32 0.0, %v1907
        %v1909 = vpop.f32.mrb[0].mxu0
        %1910 = vmatprep.mubr.f32.mxu0 0.0
        %1911 = vmatmul.mubr.f32.gmra.mrb[0].mxu0 %v1770
        %v1912 = vpop.f32.mrb[0].mxu0
        %v1913 = vadd.f32 0.0, %v1912
        %v1914 = vpop.f32.mrb[0].mxu0
        %1915 = vmatprep.mubr.f32.mxu0 0.0
        %1916 = vmatmul.mubr.f32.gmra.mrb[0].mxu0 %v1771
        %v1917 = vpop.f32.mrb[0].mxu0
        %v1918 = vadd.f32 0.0, %v1917
        %v1919 = vpop.f32.mrb[0].mxu0
        %1920 = vmatprep.mubr.f32.mxu0 0.0
        %1921 = vmatmul.mubr.f32.gmra.mrb[0].mxu0 %v1772
        %v1922 = vpop.f32.mrb[0].mxu0
        %v1923 = vadd.f32 0.0, %v1922
        %v1924 = vpop.f32.mrb[0].mxu0
        %1925 = vmatprep.mubr.f32.mxu0 0.0
        %1926 = vmatmul.mubr.f32.gmra.mrb[0].mxu0 %v1773
        %v1927 = vpop.f32.mrb[0].mxu0
        %v1928 = vadd.f32 0.0, %v1927
        %v1929 = vpop.f32.mrb[0].mxu0
        %1930 = vmatprep.mubr.f32.mxu0 0.0
        %1931 = vmatmul.mubr.f32.gmra.mrb[0].mxu0 %v1774
        %v1932 = vpop.f32.mrb[0].mxu0
        %v1933 = vadd.f32 0.0, %v1932
        %v1934 = vpop.f32.mrb[0].mxu0
        %1935 = vmatprep.mubr.f32.mxu0 0.0
        %1936 = vmatmul.mubr.f32.gmra.mrb[0].mxu0 %v1775
        %v1937 = vpop.f32.mrb[0].mxu0
        %v1938 = vadd.f32 0.0, %v1937
        %v1939 = vpop.f32.mrb[0].mxu0
        %1940 = vmatprep.mubr.f32.mxu0 0.0
        %1941 = vmatmul.mubr.f32.gmra.mrb[0].mxu0 %v1776
        %v1942 = vpop.f32.mrb[0].mxu0
        %v1943 = vadd.f32 0.0, %v1942
        %v1944 = vpop.f32.mrb[0].mxu0
        %1945 = vmatprep.mubr.f32.mxu0 0.0
        %1946 = vmatmul.mubr.f32.gmra.mrb[0].mxu0 %v1777
        %v1947 = vpop.f32.mrb[0].mxu0
        %v1948 = vadd.f32 0.0, %v1947
        %v1949 = vpop.f32.mrb[0].mxu0
        %1950 = vmatprep.mubr.f32.mxu0 0.0
        %1951 = vmatmul.mubr.f32.gmra.mrb[0].mxu0 %v1778
        %v1952 = vpop.f32.mrb[0].mxu0
        %v1953 = vadd.f32 0.0, %v1952
        %v1954 = vpop.f32.mrb[0].mxu0
        %1955 = vmatprep.mubr.f32.mxu0 0.0
        %1956 = vmatmul.mubr.f32.gmra.mrb[0].mxu0 %v1779
        %v1957 = vpop.f32.mrb[0].mxu0
        %v1958 = vadd.f32 0.0, %v1957
        %v1959 = vpop.f32.mrb[0].mxu0
        %1960 = vmatprep.mubr.f32.mxu0 0.0
        %1961 = vmatmul.mubr.f32.gmra.mrb[0].mxu0 %v1780
        %v1962 = vpop.f32.mrb[0].mxu0
        %v1963 = vadd.f32 0.0, %v1962
        %v1964 = vpop.f32.mrb[0].mxu0
        %1965 = vmatprep.mubr.f32.mxu0 0.0
        %1966 = vmatmul.mubr.f32.gmra.mrb[0].mxu0 %v1781
        %v1967 = vpop.f32.mrb[0].mxu0
        %v1968 = vadd.f32 0.0, %v1967
        %v1969 = vpop.f32.mrb[0].mxu0
        %1970 = vmatprep.mubr.f32.mxu0 0.0
        %1971 = vmatmul.mubr.f32.gmra.mrb[0].mxu0 %v1782
        %v1972 = vpop.f32.mrb[0].mxu0
        %v1973 = vadd.f32 0.0, %v1972
        %v1974 = vpop.f32.mrb[0].mxu0
        %1975 = vmatprep.mubr.f32.mxu0 0.0
        %1976 = vmatmul.mubr.f32.gmra.mrb[0].mxu0 %v1783
        %v1977 = vpop.f32.mrb[0].mxu0
        %v1978 = vadd.f32 0.0, %v1977
        %v1979 = vpop.f32.mrb[0].mxu0
        %1980 = vmatprep.mubr.f32.mxu0 0.0
        %1981 = vmatmul.mubr.f32.gmra.mrb[0].mxu0 %v1784
        %v1982 = vpop.f32.mrb[0].mxu0
        %v1983 = vadd.f32 0.0, %v1982
        %v1984 = vpop.f32.mrb[0].mxu0
        %1985 = vmatprep.mubr.f32.mxu0 0.0
        %1986 = vmatmul.mubr.f32.gmra.mrb[0].mxu0 %v1785
        %v1987 = vpop.f32.mrb[0].mxu0
        %v1988 = vadd.f32 0.0, %v1987
        %v1989 = vpop.f32.mrb[0].mxu0
        %1990 = vmatprep.mubr.f32.mxu0 0.0
        %1991 = vmatmul.mubr.f32.gmra.mrb[0].mxu0 %v1786
        %v1992 = vpop.f32.mrb[0].mxu0
        %v1993 = vadd.f32 0.0, %v1992
        %v1994 = vpop.f32.mrb[0].mxu0
        %1995 = vmatprep.mubr.f32.mxu0 0.0
        %1996 = vmatmul.mubr.f32.gmra.mrb[0].mxu0 %v1787
        %v1997 = vpop.f32.mrb[0].mxu0
        %v1998 = vadd.f32 0.0, %v1997
        %v1999 = vpop.f32.mrb[0].mxu0
        %2000 = vmatprep.mubr.f32.mxu0 0.0
        %2001 = vmatmul.mubr.f32.gmra.mrb[0].mxu0 %v1788
        %v2002 = vpop.f32.mrb[0].mxu0
        %v2003 = vadd.f32 0.0, %v2002
        %v2004 = vpop.f32.mrb[0].mxu0
        %2005 = vmatprep.mubr.f32.mxu0 0.0
        %2006 = vmatmul.mubr.f32.gmra.mrb[0].mxu0 %v1789
        %v2007 = vpop.f32.mrb[0].mxu0
        %v2008 = vadd.f32 0.0, %v2007
        %v2009 = vpop.f32.mrb[0].mxu0
        %2010 = vmatprep.mubr.f32.mxu0 0.0
        %2011 = vmatmul.mubr.f32.gmra.mrb[0].mxu0 %v1790
        %v2012 = vpop.f32.mrb[0].mxu0
        %v2013 = vadd.f32 0.0, %v2012
        %v2014 = vpop.f32.mrb[0].mxu0
        %2015 = vmatprep.mubr.f32.mxu0 0.0
        %2016 = vmatmul.mubr.f32.gmra.mrb[0].mxu0 %v1791
        %v2017 = vpop.f32.mrb[0].mxu0
        %v2018 = vadd.f32 0.0, %v2017
        %v2019 = vpop.f32.mrb[0].mxu0
        %2020 = vmatprep.mubr.f32.mxu0 0.0
        %2021 = vmatmul.mubr.f32.gmra.mrb[0].mxu0 %v1792
        %v2022 = vpop.f32.mrb[0].mxu0
        %v2023 = vadd.f32 0.0, %v2022
        %v2024 = vpop.f32.mrb[0].mxu0
        %2025 = vmatprep.mubr.f32.mxu0 0.0
        %2026 = vmatmul.mubr.f32.gmra.mrb[0].mxu0 %v1793
        %v2027 = vpop.f32.mrb[0].mxu0
        %v2028 = vadd.f32 0.0, %v2027
        %v2029 = vpop.f32.mrb[0].mxu0
        %2030 = vmatprep.mubr.f32.mxu0 0.0
        %2031 = vmatmul.mubr.f32.gmra.mrb[0].mxu0 %v1794
        %v2032 = vpop.f32.mrb[0].mxu0
        %v2033 = vadd.f32 0.0, %v2032
        %v2034 = vpop.f32.mrb[0].mxu0
        %2035 = vdwg.mxu0
        %s2036 = smul.u32 %s16, 256
        %s2037 = scalar_lea.vmem [#allocation2], %s2036
        %2038 = vst [vmem:[%s2037] sm:$0xff] %v1878
        %2039 = vst [vmem:[%s2037 + $0x8] sm:$0xff] %v1883
        %2040 = vst [vmem:[%s2037 + $0x10] sm:$0xff] %v1888
        %2041 = vst [vmem:[%s2037 + $0x18] sm:$0xff] %v1893
        %2042 = vst [vmem:[%s2037 + $0x20] sm:$0xff] %v1898
        %2043 = vst [vmem:[%s2037 + $0x28] sm:$0xff] %v1903
        %2044 = vst [vmem:[%s2037 + $0x30] sm:$0xff] %v1908
        %2045 = vst [vmem:[%s2037 + $0x38] sm:$0xff] %v1913
        %2046 = vst [vmem:[%s2037 + $0x40] sm:$0xff] %v1918
        %2047 = vst [vmem:[%s2037 + $0x48] sm:$0xff] %v1923
        %2048 = vst [vmem:[%s2037 + $0x50] sm:$0xff] %v1928
        %2049 = vst [vmem:[%s2037 + $0x58] sm:$0xff] %v1933
        %2050 = vst [vmem:[%s2037 + $0x60] sm:$0xff] %v1938
        %2051 = vst [vmem:[%s2037 + $0x68] sm:$0xff] %v1943
        %2052 = vst [vmem:[%s2037 + $0x70] sm:$0xff] %v1948
        %2053 = vst [vmem:[%s2037 + $0x78] sm:$0xff] %v1953
        %2054 = vst [vmem:[%s2037 + $0x80] sm:$0xff] %v1958
        %2055 = vst [vmem:[%s2037 + $0x88] sm:$0xff] %v1963
        %2056 = vst [vmem:[%s2037 + $0x90] sm:$0xff] %v1968
        %2057 = vst [vmem:[%s2037 + $0x98] sm:$0xff] %v1973
        %2058 = vst [vmem:[%s2037 + $0xa0] sm:$0xff] %v1978
        %2059 = vst [vmem:[%s2037 + $0xa8] sm:$0xff] %v1983
        %2060 = vst [vmem:[%s2037 + $0xb0] sm:$0xff] %v1988
        %2061 = vst [vmem:[%s2037 + $0xb8] sm:$0xff] %v1993
        %2062 = vst [vmem:[%s2037 + $0xc0] sm:$0xff] %v1998
        %2063 = vst [vmem:[%s2037 + $0xc8] sm:$0xff] %v2003
        %2064 = vst [vmem:[%s2037 + $0xd0] sm:$0xff] %v2008
        %2065 = vst [vmem:[%s2037 + $0xd8] sm:$0xff] %v2013
        %2066 = vst [vmem:[%s2037 + $0xe0] sm:$0xff] %v2018
        %2067 = vst [vmem:[%s2037 + $0xe8] sm:$0xff] %v2023
        %2068 = vst [vmem:[%s2037 + $0xf0] sm:$0xff] %v2028
        %2069 = vst [vmem:[%s2037 + $0xf8] sm:$0xff] %v2033
        %p2070 = scmp.eq.s32.totalorder %s16, 1
        // Predicated region
        $region37: #{tpu_custom_call.1} parent=35 // pred_check
          %p2071 = pneg %p2070
        $region38: #{tpu_custom_call.1} parent=35 // pred_check_branch
          %2073 = sbr.rel (%p2071) target = $region40
        $region39: #{tpu_custom_call.1} parent=35 // pred_region
          %v2074 = vld [vmem:[#allocation2] sm:$0xff]
          %v2075 = vld [vmem:[#allocation2 + $0x8] sm:$0xff]
          %v2076 = vld [vmem:[#allocation2 + $0x10] sm:$0xff]
          %v2077 = vld [vmem:[#allocation2 + $0x18] sm:$0xff]
          %v2078 = vld [vmem:[#allocation2 + $0x20] sm:$0xff]
          %v2079 = vld [vmem:[#allocation2 + $0x28] sm:$0xff]
          %v2080 = vld [vmem:[#allocation2 + $0x30] sm:$0xff]
          %v2081 = vld [vmem:[#allocation2 + $0x38] sm:$0xff]
          %v2082 = vld [vmem:[#allocation2 + $0x40] sm:$0xff]
          %v2083 = vld [vmem:[#allocation2 + $0x48] sm:$0xff]
          %v2084 = vld [vmem:[#allocation2 + $0x50] sm:$0xff]
          %v2085 = vld [vmem:[#allocation2 + $0x58] sm:$0xff]
          %v2086 = vld [vmem:[#allocation2 + $0x60] sm:$0xff]
          %v2087 = vld [vmem:[#allocation2 + $0x68] sm:$0xff]
          %v2088 = vld [vmem:[#allocation2 + $0x70] sm:$0xff]
          %v2089 = vld [vmem:[#allocation2 + $0x78] sm:$0xff]
          %v2090 = vld [vmem:[#allocation2 + $0x80] sm:$0xff]
          %v2091 = vld [vmem:[#allocation2 + $0x88] sm:$0xff]
          %v2092 = vld [vmem:[#allocation2 + $0x90] sm:$0xff]
          %v2093 = vld [vmem:[#allocation2 + $0x98] sm:$0xff]
          %v2094 = vld [vmem:[#allocation2 + $0xa0] sm:$0xff]
          %v2095 = vld [vmem:[#allocation2 + $0xa8] sm:$0xff]
          %v2096 = vld [vmem:[#allocation2 + $0xb0] sm:$0xff]
          %v2097 = vld [vmem:[#allocation2 + $0xb8] sm:$0xff]
          %v2098 = vld [vmem:[#allocation2 + $0xc0] sm:$0xff]
          %v2099 = vld [vmem:[#allocation2 + $0xc8] sm:$0xff]
          %v2100 = vld [vmem:[#allocation2 + $0xd0] sm:$0xff]
          %v2101 = vld [vmem:[#allocation2 + $0xd8] sm:$0xff]
          %v2102 = vld [vmem:[#allocation2 + $0xe0] sm:$0xff]
          %v2103 = vld [vmem:[#allocation2 + $0xe8] sm:$0xff]
          %v2104 = vld [vmem:[#allocation2 + $0xf0] sm:$0xff]
          %v2105 = vld [vmem:[#allocation2 + $0xf8] sm:$0xff]
          %v2106 = vld [vmem:[#allocation2 + $0x100] sm:$0xff]
          %v2107 = vld [vmem:[#allocation2 + $0x108] sm:$0xff]
          %v2108 = vld [vmem:[#allocation2 + $0x110] sm:$0xff]
          %v2109 = vld [vmem:[#allocation2 + $0x118] sm:$0xff]
          %v2110 = vld [vmem:[#allocation2 + $0x120] sm:$0xff]
          %v2111 = vld [vmem:[#allocation2 + $0x128] sm:$0xff]
          %v2112 = vld [vmem:[#allocation2 + $0x130] sm:$0xff]
          %v2113 = vld [vmem:[#allocation2 + $0x138] sm:$0xff]
          %v2114 = vld [vmem:[#allocation2 + $0x140] sm:$0xff]
          %v2115 = vld [vmem:[#allocation2 + $0x148] sm:$0xff]
          %v2116 = vld [vmem:[#allocation2 + $0x150] sm:$0xff]
          %v2117 = vld [vmem:[#allocation2 + $0x158] sm:$0xff]
          %v2118 = vld [vmem:[#allocation2 + $0x160] sm:$0xff]
          %v2119 = vld [vmem:[#allocation2 + $0x168] sm:$0xff]
          %v2120 = vld [vmem:[#allocation2 + $0x170] sm:$0xff]
          %v2121 = vld [vmem:[#allocation2 + $0x178] sm:$0xff]
          %v2122 = vld [vmem:[#allocation2 + $0x180] sm:$0xff]
          %v2123 = vld [vmem:[#allocation2 + $0x188] sm:$0xff]
          %v2124 = vld [vmem:[#allocation2 + $0x190] sm:$0xff]
          %v2125 = vld [vmem:[#allocation2 + $0x198] sm:$0xff]
          %v2126 = vld [vmem:[#allocation2 + $0x1a0] sm:$0xff]
          %v2127 = vld [vmem:[#allocation2 + $0x1a8] sm:$0xff]
          %v2128 = vld [vmem:[#allocation2 + $0x1b0] sm:$0xff]
          %v2129 = vld [vmem:[#allocation2 + $0x1b8] sm:$0xff]
          %v2130 = vld [vmem:[#allocation2 + $0x1c0] sm:$0xff]
          %v2131 = vld [vmem:[#allocation2 + $0x1c8] sm:$0xff]
          %v2132 = vld [vmem:[#allocation2 + $0x1d0] sm:$0xff]
          %v2133 = vld [vmem:[#allocation2 + $0x1d8] sm:$0xff]
          %v2134 = vld [vmem:[#allocation2 + $0x1e0] sm:$0xff]
          %v2135 = vld [vmem:[#allocation2 + $0x1e8] sm:$0xff]
          %v2136 = vld [vmem:[#allocation2 + $0x1f0] sm:$0xff]
          %v2137 = vld [vmem:[#allocation2 + $0x1f8] sm:$0xff]
          %v2138 = vadd.f32 %v2074, %v2075
          %v2139 = vadd.f32 %v2138, %v2076
          %v2140 = vadd.f32 %v2139, %v2077
          %v2141 = vadd.f32 %v2140, %v2078
          %v2142 = vadd.f32 %v2141, %v2079
          %v2143 = vadd.f32 %v2142, %v2080
          %v2144 = vadd.f32 %v2143, %v2081
          %v2145 = vadd.f32 %v2144, %v2082
          %v2146 = vadd.f32 %v2145, %v2083
          %v2147 = vadd.f32 %v2146, %v2084
          %v2148 = vadd.f32 %v2147, %v2085
          %v2149 = vadd.f32 %v2148, %v2086
          %v2150 = vadd.f32 %v2149, %v2087
          %v2151 = vadd.f32 %v2150, %v2088
          %v2152 = vadd.f32 %v2151, %v2089
          %v2153 = vadd.f32 %v2152, %v2090
          %v2154 = vadd.f32 %v2153, %v2091
          %v2155 = vadd.f32 %v2154, %v2092
          %v2156 = vadd.f32 %v2155, %v2093
          %v2157 = vadd.f32 %v2156, %v2094
          %v2158 = vadd.f32 %v2157, %v2095
          %v2159 = vadd.f32 %v2158, %v2096
          %v2160 = vadd.f32 %v2159, %v2097
          %v2161 = vadd.f32 %v2160, %v2098
          %v2162 = vadd.f32 %v2161, %v2099
          %v2163 = vadd.f32 %v2162, %v2100
          %v2164 = vadd.f32 %v2163, %v2101
          %v2165 = vadd.f32 %v2164, %v2102
          %v2166 = vadd.f32 %v2165, %v2103
          %v2167 = vadd.f32 %v2166, %v2104
          %v2168 = vadd.f32 %v2167, %v2105
          %v2169 = vadd.f32 %v2168, %v2106
          %v2170 = vadd.f32 %v2169, %v2107
          %v2171 = vadd.f32 %v2170, %v2108
          %v2172 = vadd.f32 %v2171, %v2109
          %v2173 = vadd.f32 %v2172, %v2110
          %v2174 = vadd.f32 %v2173, %v2111
          %v2175 = vadd.f32 %v2174, %v2112
          %v2176 = vadd.f32 %v2175, %v2113
          %v2177 = vadd.f32 %v2176, %v2114
          %v2178 = vadd.f32 %v2177, %v2115
          %v2179 = vadd.f32 %v2178, %v2116
          %v2180 = vadd.f32 %v2179, %v2117
          %v2181 = vadd.f32 %v2180, %v2118
          %v2182 = vadd.f32 %v2181, %v2119
          %v2183 = vadd.f32 %v2182, %v2120
          %v2184 = vadd.f32 %v2183, %v2121
          %v2185 = vadd.f32 %v2184, %v2122
          %v2186 = vadd.f32 %v2185, %v2123
          %v2187 = vadd.f32 %v2186, %v2124
          %v2188 = vadd.f32 %v2187, %v2125
          %v2189 = vadd.f32 %v2188, %v2126
          %v2190 = vadd.f32 %v2189, %v2127
          %v2191 = vadd.f32 %v2190, %v2128
          %v2192 = vadd.f32 %v2191, %v2129
          %v2193 = vadd.f32 %v2192, %v2130
          %v2194 = vadd.f32 %v2193, %v2131
          %v2195 = vadd.f32 %v2194, %v2132
          %v2196 = vadd.f32 %v2195, %v2133
          %v2197 = vadd.f32 %v2196, %v2134
          %v2198 = vadd.f32 %v2197, %v2135
          %v2199 = vadd.f32 %v2198, %v2136
          %v2200 = vadd.f32 %v2199, %v2137
          %v2201 = vrot.slane %v2200, 4
          %v2202 = vadd.f32 %v2200, %v2201
          %v2203 = vrot.slane %v2202, 2
          %v2204 = vadd.f32 %v2202, %v2203
          %v2205 = vrot.slane %v2204, 1
          %v2206 = vadd.f32 %v2204, %v2205
          %v2207 = vrcp.pop 512.0
          %v2208 = vmul.f32 %v2206, %v2207
          %v2209 = vsub.f32 %v2074, %v2208
          %v2210 = vsub.f32 %v2075, %v2208
          %v2211 = vsub.f32 %v2076, %v2208
          %v2212 = vsub.f32 %v2077, %v2208
          %v2213 = vsub.f32 %v2078, %v2208
          %v2214 = vsub.f32 %v2079, %v2208
          %v2215 = vsub.f32 %v2080, %v2208
          %v2216 = vsub.f32 %v2081, %v2208
          %v2217 = vsub.f32 %v2082, %v2208
          %v2218 = vsub.f32 %v2083, %v2208
          %v2219 = vsub.f32 %v2084, %v2208
          %v2220 = vsub.f32 %v2085, %v2208
          %v2221 = vsub.f32 %v2086, %v2208
          %v2222 = vsub.f32 %v2087, %v2208
          %v2223 = vsub.f32 %v2088, %v2208
          %v2224 = vsub.f32 %v2089, %v2208
          %v2225 = vsub.f32 %v2090, %v2208
          %v2226 = vsub.f32 %v2091, %v2208
          %v2227 = vsub.f32 %v2092, %v2208
          %v2228 = vsub.f32 %v2093, %v2208
          %v2229 = vsub.f32 %v2094, %v2208
          %v2230 = vsub.f32 %v2095, %v2208
          %v2231 = vsub.f32 %v2096, %v2208
          %v2232 = vsub.f32 %v2097, %v2208
          %v2233 = vsub.f32 %v2098, %v2208
          %v2234 = vsub.f32 %v2099, %v2208
          %v2235 = vsub.f32 %v2100, %v2208
          %v2236 = vsub.f32 %v2101, %v2208
          %v2237 = vsub.f32 %v2102, %v2208
          %v2238 = vsub.f32 %v2103, %v2208
          %v2239 = vsub.f32 %v2104, %v2208
          %v2240 = vsub.f32 %v2105, %v2208
          %v2241 = vsub.f32 %v2106, %v2208
          %v2242 = vsub.f32 %v2107, %v2208
          %v2243 = vsub.f32 %v2108, %v2208
          %v2244 = vsub.f32 %v2109, %v2208
          %v2245 = vsub.f32 %v2110, %v2208
          %v2246 = vsub.f32 %v2111, %v2208
          %v2247 = vsub.f32 %v2112, %v2208
          %v2248 = vsub.f32 %v2113, %v2208
          %v2249 = vsub.f32 %v2114, %v2208
          %v2250 = vsub.f32 %v2115, %v2208
          %v2251 = vsub.f32 %v2116, %v2208
          %v2252 = vsub.f32 %v2117, %v2208
          %v2253 = vsub.f32 %v2118, %v2208
          %v2254 = vsub.f32 %v2119, %v2208
          %v2255 = vsub.f32 %v2120, %v2208
          %v2256 = vsub.f32 %v2121, %v2208
          %v2257 = vsub.f32 %v2122, %v2208
          %v2258 = vsub.f32 %v2123, %v2208
          %v2259 = vsub.f32 %v2124, %v2208
          %v2260 = vsub.f32 %v2125, %v2208
          %v2261 = vsub.f32 %v2126, %v2208
          %v2262 = vsub.f32 %v2127, %v2208
          %v2263 = vsub.f32 %v2128, %v2208
          %v2264 = vsub.f32 %v2129, %v2208
          %v2265 = vsub.f32 %v2130, %v2208
          %v2266 = vsub.f32 %v2131, %v2208
          %v2267 = vsub.f32 %v2132, %v2208
          %v2268 = vsub.f32 %v2133, %v2208
          %v2269 = vsub.f32 %v2134, %v2208
          %v2270 = vsub.f32 %v2135, %v2208
          %v2271 = vsub.f32 %v2136, %v2208
          %v2272 = vsub.f32 %v2137, %v2208
          %v2273 = vmul.f32 %v2209, %v2209
          %v2274 = vmul.f32 %v2210, %v2210
          %v2275 = vmul.f32 %v2211, %v2211
          %v2276 = vmul.f32 %v2212, %v2212
          %v2277 = vmul.f32 %v2213, %v2213
          %v2278 = vmul.f32 %v2214, %v2214
          %v2279 = vmul.f32 %v2215, %v2215
          %v2280 = vmul.f32 %v2216, %v2216
          %v2281 = vmul.f32 %v2217, %v2217
          %v2282 = vmul.f32 %v2218, %v2218
          %v2283 = vmul.f32 %v2219, %v2219
          %v2284 = vmul.f32 %v2220, %v2220
          %v2285 = vmul.f32 %v2221, %v2221
          %v2286 = vmul.f32 %v2222, %v2222
          %v2287 = vmul.f32 %v2223, %v2223
          %v2288 = vmul.f32 %v2224, %v2224
          %v2289 = vmul.f32 %v2225, %v2225
          %v2290 = vmul.f32 %v2226, %v2226
          %v2291 = vmul.f32 %v2227, %v2227
          %v2292 = vmul.f32 %v2228, %v2228
          %v2293 = vmul.f32 %v2229, %v2229
          %v2294 = vmul.f32 %v2230, %v2230
          %v2295 = vmul.f32 %v2231, %v2231
          %v2296 = vmul.f32 %v2232, %v2232
          %v2297 = vmul.f32 %v2233, %v2233
          %v2298 = vmul.f32 %v2234, %v2234
          %v2299 = vmul.f32 %v2235, %v2235
          %v2300 = vmul.f32 %v2236, %v2236
          %v2301 = vmul.f32 %v2237, %v2237
          %v2302 = vmul.f32 %v2238, %v2238
          %v2303 = vmul.f32 %v2239, %v2239
          %v2304 = vmul.f32 %v2240, %v2240
          %v2305 = vmul.f32 %v2241, %v2241
          %v2306 = vmul.f32 %v2242, %v2242
          %v2307 = vmul.f32 %v2243, %v2243
          %v2308 = vmul.f32 %v2244, %v2244
          %v2309 = vmul.f32 %v2245, %v2245
          %v2310 = vmul.f32 %v2246, %v2246
          %v2311 = vmul.f32 %v2247, %v2247
          %v2312 = vmul.f32 %v2248, %v2248
          %v2313 = vmul.f32 %v2249, %v2249
          %v2314 = vmul.f32 %v2250, %v2250
          %v2315 = vmul.f32 %v2251, %v2251
          %v2316 = vmul.f32 %v2252, %v2252
          %v2317 = vmul.f32 %v2253, %v2253
          %v2318 = vmul.f32 %v2254, %v2254
          %v2319 = vmul.f32 %v2255, %v2255
          %v2320 = vmul.f32 %v2256, %v2256
          %v2321 = vmul.f32 %v2257, %v2257
          %v2322 = vmul.f32 %v2258, %v2258
          %v2323 = vmul.f32 %v2259, %v2259
          %v2324 = vmul.f32 %v2260, %v2260
          %v2325 = vmul.f32 %v2261, %v2261
          %v2326 = vmul.f32 %v2262, %v2262
          %v2327 = vmul.f32 %v2263, %v2263
          %v2328 = vmul.f32 %v2264, %v2264
          %v2329 = vmul.f32 %v2265, %v2265
          %v2330 = vmul.f32 %v2266, %v2266
          %v2331 = vmul.f32 %v2267, %v2267
          %v2332 = vmul.f32 %v2268, %v2268
          %v2333 = vmul.f32 %v2269, %v2269
          %v2334 = vmul.f32 %v2270, %v2270
          %v2335 = vmul.f32 %v2271, %v2271
          %v2336 = vmul.f32 %v2272, %v2272
          %v2337 = vadd.f32 %v2273, %v2274
          %v2338 = vadd.f32 %v2337, %v2275
          %v2339 = vadd.f32 %v2338, %v2276
          %v2340 = vadd.f32 %v2339, %v2277
          %v2341 = vadd.f32 %v2340, %v2278
          %v2342 = vadd.f32 %v2341, %v2279
          %v2343 = vadd.f32 %v2342, %v2280
          %v2344 = vadd.f32 %v2343, %v2281
          %v2345 = vadd.f32 %v2344, %v2282
          %v2346 = vadd.f32 %v2345, %v2283
          %v2347 = vadd.f32 %v2346, %v2284
          %v2348 = vadd.f32 %v2347, %v2285
          %v2349 = vadd.f32 %v2348, %v2286
          %v2350 = vadd.f32 %v2349, %v2287
          %v2351 = vadd.f32 %v2350, %v2288
          %v2352 = vadd.f32 %v2351, %v2289
          %v2353 = vadd.f32 %v2352, %v2290
          %v2354 = vadd.f32 %v2353, %v2291
          %v2355 = vadd.f32 %v2354, %v2292
          %v2356 = vadd.f32 %v2355, %v2293
          %v2357 = vadd.f32 %v2356, %v2294
          %v2358 = vadd.f32 %v2357, %v2295
          %v2359 = vadd.f32 %v2358, %v2296
          %v2360 = vadd.f32 %v2359, %v2297
          %v2361 = vadd.f32 %v2360, %v2298
          %v2362 = vadd.f32 %v2361, %v2299
          %v2363 = vadd.f32 %v2362, %v2300
          %v2364 = vadd.f32 %v2363, %v2301
          %v2365 = vadd.f32 %v2364, %v2302
          %v2366 = vadd.f32 %v2365, %v2303
          %v2367 = vadd.f32 %v2366, %v2304
          %v2368 = vadd.f32 %v2367, %v2305
          %v2369 = vadd.f32 %v2368, %v2306
          %v2370 = vadd.f32 %v2369, %v2307
          %v2371 = vadd.f32 %v2370, %v2308
          %v2372 = vadd.f32 %v2371, %v2309
          %v2373 = vadd.f32 %v2372, %v2310
          %v2374 = vadd.f32 %v2373, %v2311
          %v2375 = vadd.f32 %v2374, %v2312
          %v2376 = vadd.f32 %v2375, %v2313
          %v2377 = vadd.f32 %v2376, %v2314
          %v2378 = vadd.f32 %v2377, %v2315
          %v2379 = vadd.f32 %v2378, %v2316
          %v2380 = vadd.f32 %v2379, %v2317
          %v2381 = vadd.f32 %v2380, %v2318
          %v2382 = vadd.f32 %v2381, %v2319
          %v2383 = vadd.f32 %v2382, %v2320
          %v2384 = vadd.f32 %v2383, %v2321
          %v2385 = vadd.f32 %v2384, %v2322
          %v2386 = vadd.f32 %v2385, %v2323
          %v2387 = vadd.f32 %v2386, %v2324
          %v2388 = vadd.f32 %v2387, %v2325
          %v2389 = vadd.f32 %v2388, %v2326
          %v2390 = vadd.f32 %v2389, %v2327
          %v2391 = vadd.f32 %v2390, %v2328
          %v2392 = vadd.f32 %v2391, %v2329
          %v2393 = vadd.f32 %v2392, %v2330
          %v2394 = vadd.f32 %v2393, %v2331
          %v2395 = vadd.f32 %v2394, %v2332
          %v2396 = vadd.f32 %v2395, %v2333
          %v2397 = vadd.f32 %v2396, %v2334
          %v2398 = vadd.f32 %v2397, %v2335
          %v2399 = vadd.f32 %v2398, %v2336
          %v2400 = vrot.slane %v2399, 4
          %v2401 = vadd.f32 %v2399, %v2400
          %v2402 = vrot.slane %v2401, 2
          %v2403 = vadd.f32 %v2401, %v2402
          %v2404 = vrot.slane %v2403, 1
          %v2405 = vadd.f32 %v2403, %v2404
          %v2406 = vmul.f32 %v2405, %v2207
          %v2407 = vld [vmem:[%s2] sm:$0x1]
          %v2408 = vadd.f32 %v2406, 1e-05
          %v2409 = vrsqrt.pop %v2408
          %v2410 = vmul.f32 %v2407, %v2409
          %v2411 = vld [vmem:[%s3] sm:$0x1]
          %v2412 = vmul.f32 %v2208, %v2410
          %v2413 = vsub.f32 %v2411, %v2412
          %v2415 = vlaneseq
          %v2416 = vshrl.u32 %v2415, 7
          %v2417 = vsub.s32 0, %v2416
          %v2418 = vrot.slane %v2410, %v2417
          %v2420 = vmul.f32 %v2074, %v2418
          %v2421 = vmul.f32 %v2075, %v2418
          %v2422 = vmul.f32 %v2076, %v2418
          %v2423 = vmul.f32 %v2077, %v2418
          %v2424 = vmul.f32 %v2078, %v2418
          %v2425 = vmul.f32 %v2079, %v2418
          %v2426 = vmul.f32 %v2080, %v2418
          %v2427 = vmul.f32 %v2081, %v2418
          %v2428 = vmul.f32 %v2082, %v2418
          %v2429 = vmul.f32 %v2083, %v2418
          %v2430 = vmul.f32 %v2084, %v2418
          %v2431 = vmul.f32 %v2085, %v2418
          %v2432 = vmul.f32 %v2086, %v2418
          %v2433 = vmul.f32 %v2087, %v2418
          %v2434 = vmul.f32 %v2088, %v2418
          %v2435 = vmul.f32 %v2089, %v2418
          %v2436 = vmul.f32 %v2090, %v2418
          %v2437 = vmul.f32 %v2091, %v2418
          %v2438 = vmul.f32 %v2092, %v2418
          %v2439 = vmul.f32 %v2093, %v2418
          %v2440 = vmul.f32 %v2094, %v2418
          %v2441 = vmul.f32 %v2095, %v2418
          %v2442 = vmul.f32 %v2096, %v2418
          %v2443 = vmul.f32 %v2097, %v2418
          %v2444 = vmul.f32 %v2098, %v2418
          %v2445 = vmul.f32 %v2099, %v2418
          %v2446 = vmul.f32 %v2100, %v2418
          %v2447 = vmul.f32 %v2101, %v2418
          %v2448 = vmul.f32 %v2102, %v2418
          %v2449 = vmul.f32 %v2103, %v2418
          %v2450 = vmul.f32 %v2104, %v2418
          %v2451 = vmul.f32 %v2105, %v2418
          %v2452 = vmul.f32 %v2106, %v2418
          %v2453 = vmul.f32 %v2107, %v2418
          %v2454 = vmul.f32 %v2108, %v2418
          %v2455 = vmul.f32 %v2109, %v2418
          %v2456 = vmul.f32 %v2110, %v2418
          %v2457 = vmul.f32 %v2111, %v2418
          %v2458 = vmul.f32 %v2112, %v2418
          %v2459 = vmul.f32 %v2113, %v2418
          %v2460 = vmul.f32 %v2114, %v2418
          %v2461 = vmul.f32 %v2115, %v2418
          %v2462 = vmul.f32 %v2116, %v2418
          %v2463 = vmul.f32 %v2117, %v2418
          %v2464 = vmul.f32 %v2118, %v2418
          %v2465 = vmul.f32 %v2119, %v2418
          %v2466 = vmul.f32 %v2120, %v2418
          %v2467 = vmul.f32 %v2121, %v2418
          %v2468 = vmul.f32 %v2122, %v2418
          %v2469 = vmul.f32 %v2123, %v2418
          %v2470 = vmul.f32 %v2124, %v2418
          %v2471 = vmul.f32 %v2125, %v2418
          %v2472 = vmul.f32 %v2126, %v2418
          %v2473 = vmul.f32 %v2127, %v2418
          %v2474 = vmul.f32 %v2128, %v2418
          %v2475 = vmul.f32 %v2129, %v2418
          %v2476 = vmul.f32 %v2130, %v2418
          %v2477 = vmul.f32 %v2131, %v2418
          %v2478 = vmul.f32 %v2132, %v2418
          %v2479 = vmul.f32 %v2133, %v2418
          %v2480 = vmul.f32 %v2134, %v2418
          %v2481 = vmul.f32 %v2135, %v2418
          %v2482 = vmul.f32 %v2136, %v2418
          %v2483 = vmul.f32 %v2137, %v2418
          %v2485 = vlaneseq
          %v2486 = vshrl.u32 %v2485, 7
          %v2487 = vsub.s32 0, %v2486
          %v2488 = vrot.slane %v2413, %v2487
          %v2490 = vadd.f32 %v2420, %v2488
          %v2491 = vadd.f32 %v2421, %v2488
          %v2492 = vadd.f32 %v2422, %v2488
          %v2493 = vadd.f32 %v2423, %v2488
          %v2494 = vadd.f32 %v2424, %v2488
          %v2495 = vadd.f32 %v2425, %v2488
          %v2496 = vadd.f32 %v2426, %v2488
          %v2497 = vadd.f32 %v2427, %v2488
          %v2498 = vadd.f32 %v2428, %v2488
          %v2499 = vadd.f32 %v2429, %v2488
          %v2500 = vadd.f32 %v2430, %v2488
          %v2501 = vadd.f32 %v2431, %v2488
          %v2502 = vadd.f32 %v2432, %v2488
          %v2503 = vadd.f32 %v2433, %v2488
          %v2504 = vadd.f32 %v2434, %v2488
          %v2505 = vadd.f32 %v2435, %v2488
          %v2506 = vadd.f32 %v2436, %v2488
          %v2507 = vadd.f32 %v2437, %v2488
          %v2508 = vadd.f32 %v2438, %v2488
          %v2509 = vadd.f32 %v2439, %v2488
          %v2510 = vadd.f32 %v2440, %v2488
          %v2511 = vadd.f32 %v2441, %v2488
          %v2512 = vadd.f32 %v2442, %v2488
          %v2513 = vadd.f32 %v2443, %v2488
          %v2514 = vadd.f32 %v2444, %v2488
          %v2515 = vadd.f32 %v2445, %v2488
          %v2516 = vadd.f32 %v2446, %v2488
          %v2517 = vadd.f32 %v2447, %v2488
          %v2518 = vadd.f32 %v2448, %v2488
          %v2519 = vadd.f32 %v2449, %v2488
          %v2520 = vadd.f32 %v2450, %v2488
          %v2521 = vadd.f32 %v2451, %v2488
          %v2522 = vadd.f32 %v2452, %v2488
          %v2523 = vadd.f32 %v2453, %v2488
          %v2524 = vadd.f32 %v2454, %v2488
          %v2525 = vadd.f32 %v2455, %v2488
          %v2526 = vadd.f32 %v2456, %v2488
          %v2527 = vadd.f32 %v2457, %v2488
          %v2528 = vadd.f32 %v2458, %v2488
          %v2529 = vadd.f32 %v2459, %v2488
          %v2530 = vadd.f32 %v2460, %v2488
          %v2531 = vadd.f32 %v2461, %v2488
          %v2532 = vadd.f32 %v2462, %v2488
          %v2533 = vadd.f32 %v2463, %v2488
          %v2534 = vadd.f32 %v2464, %v2488
          %v2535 = vadd.f32 %v2465, %v2488
          %v2536 = vadd.f32 %v2466, %v2488
          %v2537 = vadd.f32 %v2467, %v2488
          %v2538 = vadd.f32 %v2468, %v2488
          %v2539 = vadd.f32 %v2469, %v2488
          %v2540 = vadd.f32 %v2470, %v2488
          %v2541 = vadd.f32 %v2471, %v2488
          %v2542 = vadd.f32 %v2472, %v2488
          %v2543 = vadd.f32 %v2473, %v2488
          %v2544 = vadd.f32 %v2474, %v2488
          %v2545 = vadd.f32 %v2475, %v2488
          %v2546 = vadd.f32 %v2476, %v2488
          %v2547 = vadd.f32 %v2477, %v2488
          %v2548 = vadd.f32 %v2478, %v2488
          %v2549 = vadd.f32 %v2479, %v2488
          %v2550 = vadd.f32 %v2480, %v2488
          %v2551 = vadd.f32 %v2481, %v2488
          %v2552 = vadd.f32 %v2482, %v2488
          %v2553 = vadd.f32 %v2483, %v2488
          %v2554 = vmax.f32 %v2490, 0.0
          %v2555 = vmax.f32 %v2491, 0.0
          %v2556 = vmax.f32 %v2492, 0.0
          %v2557 = vmax.f32 %v2493, 0.0
          %v2558 = vmax.f32 %v2494, 0.0
          %v2559 = vmax.f32 %v2495, 0.0
          %v2560 = vmax.f32 %v2496, 0.0
          %v2561 = vmax.f32 %v2497, 0.0
          %v2562 = vmax.f32 %v2498, 0.0
          %v2563 = vmax.f32 %v2499, 0.0
          %v2564 = vmax.f32 %v2500, 0.0
          %v2565 = vmax.f32 %v2501, 0.0
          %v2566 = vmax.f32 %v2502, 0.0
          %v2567 = vmax.f32 %v2503, 0.0
          %v2568 = vmax.f32 %v2504, 0.0
          %v2569 = vmax.f32 %v2505, 0.0
          %v2570 = vmax.f32 %v2506, 0.0
          %v2571 = vmax.f32 %v2507, 0.0
          %v2572 = vmax.f32 %v2508, 0.0
          %v2573 = vmax.f32 %v2509, 0.0
          %v2574 = vmax.f32 %v2510, 0.0
          %v2575 = vmax.f32 %v2511, 0.0
          %v2576 = vmax.f32 %v2512, 0.0
          %v2577 = vmax.f32 %v2513, 0.0
          %v2578 = vmax.f32 %v2514, 0.0
          %v2579 = vmax.f32 %v2515, 0.0
          %v2580 = vmax.f32 %v2516, 0.0
          %v2581 = vmax.f32 %v2517, 0.0
          %v2582 = vmax.f32 %v2518, 0.0
          %v2583 = vmax.f32 %v2519, 0.0
          %v2584 = vmax.f32 %v2520, 0.0
          %v2585 = vmax.f32 %v2521, 0.0
          %v2586 = vmax.f32 %v2522, 0.0
          %v2587 = vmax.f32 %v2523, 0.0
          %v2588 = vmax.f32 %v2524, 0.0
          %v2589 = vmax.f32 %v2525, 0.0
          %v2590 = vmax.f32 %v2526, 0.0
          %v2591 = vmax.f32 %v2527, 0.0
          %v2592 = vmax.f32 %v2528, 0.0
          %v2593 = vmax.f32 %v2529, 0.0
          %v2594 = vmax.f32 %v2530, 0.0
          %v2595 = vmax.f32 %v2531, 0.0
          %v2596 = vmax.f32 %v2532, 0.0
          %v2597 = vmax.f32 %v2533, 0.0
          %v2598 = vmax.f32 %v2534, 0.0
          %v2599 = vmax.f32 %v2535, 0.0
          %v2600 = vmax.f32 %v2536, 0.0
          %v2601 = vmax.f32 %v2537, 0.0
          %v2602 = vmax.f32 %v2538, 0.0
          %v2603 = vmax.f32 %v2539, 0.0
          %v2604 = vmax.f32 %v2540, 0.0
          %v2605 = vmax.f32 %v2541, 0.0
          %v2606 = vmax.f32 %v2542, 0.0
          %v2607 = vmax.f32 %v2543, 0.0
          %v2608 = vmax.f32 %v2544, 0.0
          %v2609 = vmax.f32 %v2545, 0.0
          %v2610 = vmax.f32 %v2546, 0.0
          %v2611 = vmax.f32 %v2547, 0.0
          %v2612 = vmax.f32 %v2548, 0.0
          %v2613 = vmax.f32 %v2549, 0.0
          %v2614 = vmax.f32 %v2550, 0.0
          %v2615 = vmax.f32 %v2551, 0.0
          %v2616 = vmax.f32 %v2552, 0.0
          %v2617 = vmax.f32 %v2553, 0.0
          %2618 = vst [vmem:[#allocation3] sm:$0xff] %v2554
          %2619 = vst [vmem:[#allocation3 + $0x8] sm:$0xff] %v2555
          %2620 = vst [vmem:[#allocation3 + $0x10] sm:$0xff] %v2556
          %2621 = vst [vmem:[#allocation3 + $0x18] sm:$0xff] %v2557
          %2622 = vst [vmem:[#allocation3 + $0x20] sm:$0xff] %v2558
          %2623 = vst [vmem:[#allocation3 + $0x28] sm:$0xff] %v2559
          %2624 = vst [vmem:[#allocation3 + $0x30] sm:$0xff] %v2560
          %2625 = vst [vmem:[#allocation3 + $0x38] sm:$0xff] %v2561
          %2626 = vst [vmem:[#allocation3 + $0x40] sm:$0xff] %v2562
          %2627 = vst [vmem:[#allocation3 + $0x48] sm:$0xff] %v2563
          %2628 = vst [vmem:[#allocation3 + $0x50] sm:$0xff] %v2564
          %2629 = vst [vmem:[#allocation3 + $0x58] sm:$0xff] %v2565
          %2630 = vst [vmem:[#allocation3 + $0x60] sm:$0xff] %v2566
          %2631 = vst [vmem:[#allocation3 + $0x68] sm:$0xff] %v2567
          %2632 = vst [vmem:[#allocation3 + $0x70] sm:$0xff] %v2568
          %2633 = vst [vmem:[#allocation3 + $0x78] sm:$0xff] %v2569
          %2634 = vst [vmem:[#allocation3 + $0x80] sm:$0xff] %v2570
          %2635 = vst [vmem:[#allocation3 + $0x88] sm:$0xff] %v2571
          %2636 = vst [vmem:[#allocation3 + $0x90] sm:$0xff] %v2572
          %2637 = vst [vmem:[#allocation3 + $0x98] sm:$0xff] %v2573
          %2638 = vst [vmem:[#allocation3 + $0xa0] sm:$0xff] %v2574
          %2639 = vst [vmem:[#allocation3 + $0xa8] sm:$0xff] %v2575
          %2640 = vst [vmem:[#allocation3 + $0xb0] sm:$0xff] %v2576
          %2641 = vst [vmem:[#allocation3 + $0xb8] sm:$0xff] %v2577
          %2642 = vst [vmem:[#allocation3 + $0xc0] sm:$0xff] %v2578
          %2643 = vst [vmem:[#allocation3 + $0xc8] sm:$0xff] %v2579
          %2644 = vst [vmem:[#allocation3 + $0xd0] sm:$0xff] %v2580
          %2645 = vst [vmem:[#allocation3 + $0xd8] sm:$0xff] %v2581
          %2646 = vst [vmem:[#allocation3 + $0xe0] sm:$0xff] %v2582
          %2647 = vst [vmem:[#allocation3 + $0xe8] sm:$0xff] %v2583
          %2648 = vst [vmem:[#allocation3 + $0xf0] sm:$0xff] %v2584
          %2649 = vst [vmem:[#allocation3 + $0xf8] sm:$0xff] %v2585
          %2650 = vst [vmem:[#allocation3 + $0x100] sm:$0xff] %v2586
          %2651 = vst [vmem:[#allocation3 + $0x108] sm:$0xff] %v2587
          %2652 = vst [vmem:[#allocation3 + $0x110] sm:$0xff] %v2588
          %2653 = vst [vmem:[#allocation3 + $0x118] sm:$0xff] %v2589
          %2654 = vst [vmem:[#allocation3 + $0x120] sm:$0xff] %v2590
          %2655 = vst [vmem:[#allocation3 + $0x128] sm:$0xff] %v2591
          %2656 = vst [vmem:[#allocation3 + $0x130] sm:$0xff] %v2592
          %2657 = vst [vmem:[#allocation3 + $0x138] sm:$0xff] %v2593
          %2658 = vst [vmem:[#allocation3 + $0x140] sm:$0xff] %v2594
          %2659 = vst [vmem:[#allocation3 + $0x148] sm:$0xff] %v2595
          %2660 = vst [vmem:[#allocation3 + $0x150] sm:$0xff] %v2596
          %2661 = vst [vmem:[#allocation3 + $0x158] sm:$0xff] %v2597
          %2662 = vst [vmem:[#allocation3 + $0x160] sm:$0xff] %v2598
          %2663 = vst [vmem:[#allocation3 + $0x168] sm:$0xff] %v2599
          %2664 = vst [vmem:[#allocation3 + $0x170] sm:$0xff] %v2600
          %2665 = vst [vmem:[#allocation3 + $0x178] sm:$0xff] %v2601
          %2666 = vst [vmem:[#allocation3 + $0x180] sm:$0xff] %v2602
          %2667 = vst [vmem:[#allocation3 + $0x188] sm:$0xff] %v2603
          %2668 = vst [vmem:[#allocation3 + $0x190] sm:$0xff] %v2604
          %2669 = vst [vmem:[#allocation3 + $0x198] sm:$0xff] %v2605
          %2670 = vst [vmem:[#allocation3 + $0x1a0] sm:$0xff] %v2606
          %2671 = vst [vmem:[#allocation3 + $0x1a8] sm:$0xff] %v2607
          %2672 = vst [vmem:[#allocation3 + $0x1b0] sm:$0xff] %v2608
          %2673 = vst [vmem:[#allocation3 + $0x1b8] sm:$0xff] %v2609
          %2674 = vst [vmem:[#allocation3 + $0x1c0] sm:$0xff] %v2610
          %2675 = vst [vmem:[#allocation3 + $0x1c8] sm:$0xff] %v2611
          %2676 = vst [vmem:[#allocation3 + $0x1d0] sm:$0xff] %v2612
          %2677 = vst [vmem:[#allocation3 + $0x1d8] sm:$0xff] %v2613
          %2678 = vst [vmem:[#allocation3 + $0x1e0] sm:$0xff] %v2614
          %2679 = vst [vmem:[#allocation3 + $0x1e8] sm:$0xff] %v2615
          %2680 = vst [vmem:[#allocation3 + $0x1f0] sm:$0xff] %v2616
          %2681 = vst [vmem:[#allocation3 + $0x1f8] sm:$0xff] %v2617
        $region40: #{tpu_custom_call.1} parent=35 // pred_fallthru
          _
        // Predicated region
        $region41: #{tpu_custom_call.1} parent=35 // pred_check
          %p2682 = pneg %p118
        $region42: #{tpu_custom_call.1} parent=35 // pred_check_branch
          %2684 = sbr.rel (%p2682) target = $region44
        $region43: #{tpu_custom_call.1} parent=35 // pred_region
          %s2686 = ssub.s32 8192, 8192
          %2687 = vsyncadd [#allocation4], %s2686
          %s2688 = sshll.u32 [#allocation3], 4
          %s2689 = int_to_ptr.vmem [resolvable:$true] %s2688
          %2694 = dma.vmem_to_hbm [thread:$0]  %s2689, 8192, %s4, [#allocation4], 128, 128, 8
        $region44: #{tpu_custom_call.1} parent=35 // pred_fallthru
          _
        // Predicated region
        $region45: #{tpu_custom_call.1} parent=35 // pred_check
          %p2695 = pneg %p118
        $region46: #{tpu_custom_call.1} parent=35 // pred_check_branch
          %2697 = sbr.rel (%p2695) target = $region48
        $region47: #{tpu_custom_call.1} parent=35 // pred_region
          %2698 = dma.done [#allocation4], 8192
        $region48: #{tpu_custom_call.1} parent=35 // pred_fallthru
          _
      $region36: #{tpu_custom_call.1} parent=5 // pred_fallthru
        _
      %p2699 = scmp.le.s32.totalorder 2, %s11
      // Predicated region
      $region49: #{tpu_custom_call.1} parent=5 // pred_check
        %p2700 = pneg %p2699
      $region50: #{tpu_custom_call.1} parent=5 // pred_check_branch
        %2702 = sbr.rel (%p2700) target = $region52
      $region51: #{tpu_custom_call.1} parent=5 // pred_region
        %s2703 = ssub.s32 %s11, 2
      $region52: #{tpu_custom_call.1} parent=5 // pred_fallthru
        _
    $region6: #{tpu_custom_call.1} parent=1 // loop_footer
      %s15 = sadd.s32 1, %s11
    $region7: #{tpu_custom_call.1} parent=1 // loop_footer_branch
      %10 = sbr.rel target = $region3
    $region8: #{tpu_custom_call.1} parent=1 // loop_exit
      _
    %2704 = vsyncpa [#allocation4], 1
    %s2705 = scalar_lea.sflag [#allocation4], 1
    %2706 = vsyncpa %s2705, 1

</llo_original>
